<compile_context>
chip_gen: v7x
topology: tpu7x:2x2x1
jax: 0.10.0
libtpu: 0.0.40
codegen_flags: <defaults>
</compile_context>

<pallas_src>
import functools

import jax
import jax.numpy as jnp
from jax.experimental import pallas as pl
from jax.experimental.pallas import tpu as pltpu


def _round_up(x, m):
    return ((x + m - 1) // m) * m


def _lm_kernel(*refs, has_hidden):
    if has_hidden:
        (emb_ref, w_in_ref, b_in_ref, w_hid_ref, b_hid_ref,
         w_out_ref, b_out_ref, out_ref, x_ref) = refs
    else:
        (emb_ref, w_in_ref, b_in_ref,
         w_out_ref, b_out_ref, out_ref, x_ref) = refs

    # Compute the input layer + collapsed hidden stack ONCE per batch tile
    # (vocab grid axis j is innermost / "arbitrary"); reuse the bf16 result
    # from VMEM scratch for every vocab tile.
    @pl.when(pl.program_id(1) == 0)
    def _():
        x = jnp.tanh(
            jnp.dot(emb_ref[...], w_in_ref[...],
                    preferred_element_type=jnp.float32)
            + b_in_ref[...])
        if has_hidden:
            # The L hidden Linear layers have no activation between them, so
            # they were collapsed exactly into one (H, H) weight + folded bias;
            # the single tanh matches torch.tanh(self.hidden_network(x)).
            x = jnp.tanh(
                jnp.dot(x.astype(jnp.bfloat16), w_hid_ref[...],
                        preferred_element_type=jnp.float32)
                + b_hid_ref[...])
        x_ref[...] = x.astype(jnp.bfloat16)

    # dropout: identity in eval/inference mode.
    # TODO(synk): training-mode dropout (random mask + 1/(1-p) scale) not applied.

    # output_layer (no activation): vocab tile j of the logits.
    out_ref[...] = (
        jnp.dot(x_ref[...], w_out_ref[...],
                preferred_element_type=jnp.float32)
        + b_out_ref[...]).astype(out_ref.dtype)


def prepare_params(params, number_of_layers):
    """One-time param prep: collapse the activation-free hidden stack, pad all
    matmul dims to MXU/lane-aligned shapes with zeros (exact, since tanh(0)=0
    and zero rows/cols contribute nothing), cast matmul weights to bf16."""
    emb = params["embedding"].astype(jnp.float32)               # (vocab, E)
    w_in = params["w_in"].astype(jnp.float32)                   # (C*E, H)
    b_in = params["b_in"].astype(jnp.float32).reshape(1, -1)    # (1, H)
    w_out = params["w_out"].astype(jnp.float32)                 # (H, V)
    b_out = params["b_out"].astype(jnp.float32).reshape(1, -1)  # (1, V)

    K, H = w_in.shape
    V = w_out.shape[1]
    # 256-aligned contraction/output dims: fills the 2x256^2 MXUs on v6e/v7x,
    # costs nothing on v5e's 128-wide MXU.
    Kp = _round_up(K, 256)
    Hp = _round_up(H, 256)
    Vp = _round_up(V, 256)
    if Vp > 1024:
        # Large vocab: tiled at 512; pad only to a 512 multiple (no 1024
        # over-padding -> no wasted flops/bytes on every call).
        Vp = _round_up(V, 512)

    prepared = {
        # bf16 table: gather reads half the HBM bytes and feeds the MXU directly.
        "embedding": emb.astype(jnp.bfloat16),
        "w_in": jnp.zeros((Kp, Hp), jnp.float32).at[:K, :H].set(w_in).astype(jnp.bfloat16),
        "b_in": jnp.zeros((1, Hp), jnp.float32).at[:, :H].set(b_in),
        "w_out": jnp.zeros((Hp, Vp), jnp.float32).at[:H, :V].set(w_out).astype(jnp.bfloat16),
        "b_out": jnp.zeros((1, Vp), jnp.float32).at[:, :V].set(b_out),
    }

    if number_of_layers > 0:
        # nn.Sequential of Linear layers with NO activation between them and a
        # single tanh applied after the stack -> exact collapse at load time.
        w_h = params["w_h"].astype(jnp.float32)   # (L, H, H)  (in, out) layout
        b_h = params["b_h"].astype(jnp.float32)   # (L, H)
        Wc = w_h[0]
        bc = b_h[0]
        for l in range(1, number_of_layers):
            bc = bc @ w_h[l] + b_h[l]
            Wc = Wc @ w_h[l]
        prepared["w_hid"] = jnp.zeros((Hp, Hp), jnp.float32).at[:H, :H].set(Wc).astype(jnp.bfloat16)
        prepared["b_hid"] = jnp.zeros((1, Hp), jnp.float32).at[0, :H].set(bc)
    return prepared


@functools.partial(jax.jit,
                   static_argnames=("vocab", "out_dtype", "single_buffer_weights"))
def language_model_forward(input_ids, prepared, *, vocab,
                           out_dtype=jnp.float32, single_buffer_weights=True):
    """input_ids: (B, context) int32 token ids. Returns logits (B, vocab)."""
    emb_table = prepared["embedding"]
    w_in, b_in = prepared["w_in"], prepared["b_in"]
    w_out, b_out = prepared["w_out"], prepared["b_out"]
    has_hidden = "w_hid" in prepared

    B, context = input_ids.shape
    E = emb_table.shape[1]
    K = context * E
    Kp, Hp = w_in.shape
    Vp = w_out.shape[1]
    TILE_V = Vp if Vp <= 1024 else 512

    # Batch tile: single tile up to 256 rows, else 256-row tiles (fills the
    # 256-wide MXU M dim on v6e/v7x; raises flops/byte of the w_out stream).
    TILE_B = _round_up(B, 16) if B <= 256 else 256
    B_pad = _round_up(B, TILE_B)

    # Embedding lookup (gather) stays XLA glue, now in bf16; flatten + zero-pad.
    # TODO(synk): gather could be fused into the kernel (scalar-prefetched ids
    # + DMA gather from an HBM-resident table) to save one HBM round trip.
    emb = jnp.take(emb_table, input_ids, axis=0).reshape(B, K)
    emb = jnp.pad(emb, ((0, B_pad - B), (0, Kp - K)))

    n_b = B_pad // TILE_B
    n_v = Vp // TILE_V
    grid = (n_b, n_v)   # vocab innermost: j==0 recompute precedes every reuse
    const = lambda i, j: (0, 0)

    def const_spec(shape):
        # Never-changing weight blocks need no double buffering; halving their
        # footprint matters most on v7x's 64 MiB VMEM.
        if single_buffer_weights and hasattr(pl, "Buffered"):
            return pl.BlockSpec(shape, const, pipeline_mode=pl.Buffered(1))
        return pl.BlockSpec(shape, const)

    in_specs = [
        pl.BlockSpec((TILE_B, Kp), lambda i, j: (i, 0)),   # activations: batch-tiled
        const_spec((Kp, Hp)),                              # resident weights
        const_spec((1, Hp)),
    ]
    operands = [emb, w_in, b_in]
    if has_hidden:
        in_specs += [const_spec((Hp, Hp)), const_spec((1, Hp))]
        operands += [prepared["w_hid"], prepared["b_hid"]]
    in_specs += [
        pl.BlockSpec((Hp, TILE_V), lambda i, j: (0, j)),   # vocab-tiled projection
        pl.BlockSpec((1, TILE_V), lambda i, j: (0, j)),
    ]
    operands += [w_out, b_out]

    out_itemsize = jnp.dtype(out_dtype).itemsize
    weight_buf = 1 if single_buffer_weights else 2
    # Explicit VMEM budget (double-buffered streams + single-buffered weights
    # + x scratch), so the layout fits v7x (64 MiB) and v5e's scoped default.
    vmem_bytes = (
        2 * TILE_B * Kp * 2
        + weight_buf * (Kp * Hp * 2 + Hp * 4)
        + (weight_buf * (Hp * Hp * 2 + Hp * 4) if has_hidden else 0)
        + 2 * (Hp * TILE_V * 2 + TILE_V * 4)
        + 2 * TILE_B * TILE_V * out_itemsize
        + TILE_B * Hp * 2)
    vmem_limit = int(min(100 << 20, max(vmem_bytes * 5 // 4 + (4 << 20), 32 << 20)))

    # Honest cost: x computed once per batch tile; w_out re-streamed per batch tile.
    flops = 2 * B_pad * (Kp * Hp + (Hp * Hp if has_hidden else 0) + Hp * Vp)
    transcendentals = B_pad * Hp * (2 if has_hidden else 1)
    bytes_accessed = (
        B_pad * Kp * 2
        + Kp * Hp * 2 + Hp * 4
        + ((Hp * Hp * 2 + Hp * 4) if has_hidden else 0)
        + n_b * (Hp * Vp * 2 + Vp * 4)
        + B_pad * Vp * out_itemsize)

    out_padded = pl.pallas_call(
        functools.partial(_lm_kernel, has_hidden=has_hidden),
        out_shape=jax.ShapeDtypeStruct((B_pad, Vp), out_dtype),
        grid=grid,
        in_specs=in_specs,
        out_specs=pl.BlockSpec((TILE_B, TILE_V), lambda i, j: (i, j)),
        scratch_shapes=[pltpu.VMEM((TILE_B, Hp), jnp.bfloat16)],
        compiler_params=pltpu.CompilerParams(
            dimension_semantics=("parallel", "arbitrary"),
            vmem_limit_bytes=vmem_limit),
        cost_estimate=pl.CostEstimate(
            flops=flops, transcendentals=transcendentals,
            bytes_accessed=bytes_accessed),
    )(*operands)

    # TODO(synk): for very large context*E (Kp >> 10k) add an inner K-tiled
    # pipeline for the first matmul instead of one resident (Kp, Hp) block.
    # TODO(synk): for single-batch-tile inference on v7x, add a 2-way outer
    # "parallel" vocab split so both TensorCores get work.

    return out_padded[:B, :vocab]


def reference_forward(input_ids, params, number_of_layers):
    """Pure-JAX f32 reference matching the PyTorch forward (eval mode)."""
    B = input_ids.shape[0]
    emb = jnp.take(params["embedding"], input_ids, axis=0).reshape(B, -1)
    x = jnp.tanh(emb @ params["w_in"] + params["b_in"])
    if number_of_layers > 0:
        h = x
        for l in range(number_of_layers):
            h = h @ params["w_h"][l] + params["b_h"][l]
        x = jnp.tanh(h)
    return x @ params["w_out"] + params["b_out"]


def init_params(key, context, embedding_size, hidden_size, number_of_layers, vocab):
    ks = jax.random.split(key, 8)
    scale = 0.05
    return {
        "embedding": scale * jax.random.normal(ks[0], (vocab, embedding_size), jnp.float32),
        # PyTorch Linear stores (out, in); we store the transpose (in, out).
        "w_in": scale * jax.random.normal(ks[1], (embedding_size * context, hidden_size), jnp.float32),
        "b_in": scale * jax.random.normal(ks[2], (1, hidden_size), jnp.float32),
        "w_h": scale * jax.random.normal(ks[3], (number_of_layers, hidden_size, hidden_size), jnp.float32),
        "b_h": scale * jax.random.normal(ks[4], (number_of_layers, hidden_size), jnp.float32),
        "w_out": scale * jax.random.normal(ks[5], (hidden_size, vocab), jnp.float32),
        "b_out": scale * jax.random.normal(ks[6], (1, vocab), jnp.float32),
    }


if __name__ == "__main__":
    # Small, deterministic configuration.
    context = 4
    embedding_size = 16
    hidden_size = 32
    number_of_layers = 2
    vocab = 64
    dropout_prob = 0.1  # identity in eval mode
    batch = 8

    key = jax.random.PRNGKey(0)
    pkey, ikey = jax.random.split(key)
    params = init_params(pkey, context, embedding_size, hidden_size,
                         number_of_layers, vocab)
    input_ids = jax.random.randint(ikey, (batch, context), 0, vocab, dtype=jnp.int32)

    prepared = prepare_params(params, number_of_layers)

    try:
        logits = language_model_forward(input_ids, prepared, vocab=vocab)
        logits = jax.block_until_ready(logits)
    except Exception:
        # Fall back to default double-buffered weight specs if this jax/libtpu
        # build rejects pl.Buffered(1) single-buffering.
        logits = language_model_forward(input_ids, prepared, vocab=vocab,
                                        single_buffer_weights=False)
        logits = jax.block_until_ready(logits)

    assert logits.shape == (batch, vocab), logits.shape

    # Validate against the f32 layer-by-layer reference (bf16 gather/matmuls +
    # collapsed hidden stack introduce only tiny rounding differences).
    ref = reference_forward(input_ids, params, number_of_layers)
    max_err = float(jnp.max(jnp.abs(logits - ref)))
    assert max_err < 2e-2, f"max abs err vs f32 reference: {max_err}"
    print("KERNEL_OK")
</pallas_src>

<mosaic_0001>
module attributes {stable_mosaic.version = 11 : i64} {
  func.func @_lm_kernel(%arg0: i32, %arg1: i32, %arg2: memref<16x256xbf16, #tpu.memory_space<vmem>>, %arg3: memref<256x256xbf16, #tpu.memory_space<vmem>>, %arg4: memref<1x256xf32, #tpu.memory_space<vmem>>, %arg5: memref<256x256xbf16, #tpu.memory_space<vmem>>, %arg6: memref<1x256xf32, #tpu.memory_space<vmem>>, %arg7: memref<256x256xbf16, #tpu.memory_space<vmem>>, %arg8: memref<1x256xf32, #tpu.memory_space<vmem>>, %arg9: memref<16x256xf32, #tpu.memory_space<vmem>>, %arg10: memref<16x256xbf16, #tpu.memory_space<vmem>>) attributes {dimension_semantics = [#tpu.dimension_semantics<parallel>, #tpu.dimension_semantics<arbitrary>], iteration_bounds = array<i64: 1, 1>, scalar_prefetch = 0 : i64, scratch_operands = 1 : i64, tpu.core_type = #tpu.core_type<tc>, window_params = [{transform_indices = @transform_0, window_bounds = array<i64: 16, 256>}, {pipeline_mode = #tpu.pipeline_mode<synchronous>, transform_indices = @transform_1, window_bounds = array<i64: 256, 256>}, {pipeline_mode = #tpu.pipeline_mode<synchronous>, transform_indices = @transform_2, window_bounds = array<i64: 1, 256>}, {pipeline_mode = #tpu.pipeline_mode<synchronous>, transform_indices = @transform_3, window_bounds = array<i64: 256, 256>}, {pipeline_mode = #tpu.pipeline_mode<synchronous>, transform_indices = @transform_4, window_bounds = array<i64: 1, 256>}, {transform_indices = @transform_5, window_bounds = array<i64: 256, 256>}, {transform_indices = @transform_6, window_bounds = array<i64: 1, 256>}, {transform_indices = @transform_7, window_bounds = array<i64: 16, 256>}]} {
    %c0_i32 = arith.constant 0 : i32
    %0 = arith.cmpi eq, %arg1, %c0_i32 : i32
    %1 = arith.extui %0 : i1 to i32
    %c0_i32_0 = arith.constant 0 : i32
    %2 = arith.cmpi ne, %1, %c0_i32_0 : i32
    scf.if %2 {
      %c0_8 = arith.constant 0 : index
      %c0_9 = arith.constant 0 : index
      %10 = vector.load %arg2[%c0_8, %c0_9] : memref<16x256xbf16, #tpu.memory_space<vmem>>, vector<16x256xbf16>
      %c0_10 = arith.constant 0 : index
      %c0_11 = arith.constant 0 : index
      %11 = vector.load %arg3[%c0_10, %c0_11] : memref<256x256xbf16, #tpu.memory_space<vmem>>, vector<256x256xbf16>
      %cst_12 = arith.constant dense<0.000000e+00> : vector<16x256xf32>
      %12 = tpu.matmul %10, %11, %cst_12 {dimension_numbers = #tpu.dot_dimension_numbers<[1], [0], [0], [1], [0, 0, 1, 1], [], []>} : vector<16x256xbf16>, vector<256x256xbf16>, vector<16x256xf32> -> vector<16x256xf32>
      %c0_13 = arith.constant 0 : index
      %c0_14 = arith.constant 0 : index
      %13 = vector.load %arg4[%c0_13, %c0_14] : memref<1x256xf32, #tpu.memory_space<vmem>>, vector<1x256xf32>
      %14 = vector.broadcast %13 : vector<1x256xf32> to vector<16x256xf32>
      %15 = arith.addf %12, %14 : vector<16x256xf32>
      %16 = math.tanh %15 : vector<16x256xf32>
      %17 = arith.truncf %16 : vector<16x256xf32> to vector<16x256xbf16>
      %c0_15 = arith.constant 0 : index
      %c0_16 = arith.constant 0 : index
      %18 = vector.load %arg5[%c0_15, %c0_16] : memref<256x256xbf16, #tpu.memory_space<vmem>>, vector<256x256xbf16>
      %cst_17 = arith.constant dense<0.000000e+00> : vector<16x256xf32>
      %19 = tpu.matmul %17, %18, %cst_17 {dimension_numbers = #tpu.dot_dimension_numbers<[1], [0], [0], [1], [0, 0, 1, 1], [], []>} : vector<16x256xbf16>, vector<256x256xbf16>, vector<16x256xf32> -> vector<16x256xf32>
      %c0_18 = arith.constant 0 : index
      %c0_19 = arith.constant 0 : index
      %20 = vector.load %arg6[%c0_18, %c0_19] : memref<1x256xf32, #tpu.memory_space<vmem>>, vector<1x256xf32>
      %21 = vector.broadcast %20 : vector<1x256xf32> to vector<16x256xf32>
      %22 = arith.addf %19, %21 : vector<16x256xf32>
      %23 = math.tanh %22 : vector<16x256xf32>
      %24 = arith.truncf %23 : vector<16x256xf32> to vector<16x256xbf16>
      %c0_20 = arith.constant 0 : index
      %c0_21 = arith.constant 0 : index
      %25 = vector.load %arg10[%c0_20, %c0_21] : memref<16x256xbf16, #tpu.memory_space<vmem>>, vector<16x256xbf16>
      tpu.vector_store %arg10[%c0_20, %c0_21], %24 {strides = array<i32>} : memref<16x256xbf16, #tpu.memory_space<vmem>>, vector<16x256xbf16>,
    } else {
    }
    %c0 = arith.constant 0 : index
    %c0_1 = arith.constant 0 : index
    %3 = vector.load %arg10[%c0, %c0_1] : memref<16x256xbf16, #tpu.memory_space<vmem>>, vector<16x256xbf16>
    %c0_2 = arith.constant 0 : index
    %c0_3 = arith.constant 0 : index
    %4 = vector.load %arg7[%c0_2, %c0_3] : memref<256x256xbf16, #tpu.memory_space<vmem>>, vector<256x256xbf16>
    %cst = arith.constant dense<0.000000e+00> : vector<16x256xf32>
    %5 = tpu.matmul %3, %4, %cst {dimension_numbers = #tpu.dot_dimension_numbers<[1], [0], [0], [1], [0, 0, 1, 1], [], []>} : vector<16x256xbf16>, vector<256x256xbf16>, vector<16x256xf32> -> vector<16x256xf32>
    %c0_4 = arith.constant 0 : index
    %c0_5 = arith.constant 0 : index
    %6 = vector.load %arg8[%c0_4, %c0_5] : memref<1x256xf32, #tpu.memory_space<vmem>>, vector<1x256xf32>
    %7 = vector.broadcast %6 : vector<1x256xf32> to vector<16x256xf32>
    %8 = arith.addf %5, %7 : vector<16x256xf32>
    %c0_6 = arith.constant 0 : index
    %c0_7 = arith.constant 0 : index
    %9 = vector.load %arg9[%c0_6, %c0_7] : memref<16x256xf32, #tpu.memory_space<vmem>>, vector<16x256xf32>
    tpu.vector_store %arg9[%c0_6, %c0_7], %8 {strides = array<i32>} : memref<16x256xf32, #tpu.memory_space<vmem>>, vector<16x256xf32>,
    return
  }
  func.func @transform_0(%arg0: i32, %arg1: i32) -> (i32, i32) {
    %c0_i32 = arith.constant 0 : i32
    %c0_i32_0 = arith.constant 0 : i32
    return %arg0, %c0_i32 : i32, i32
  }
  func.func @transform_1(%arg0: i32, %arg1: i32) -> (i32, i32) {
    %c0_i32 = arith.constant 0 : i32
    %c0_i32_0 = arith.constant 0 : i32
    %c0_i32_1 = arith.constant 0 : i32
    return %c0_i32, %c0_i32_0 : i32, i32
  }
  func.func @transform_2(%arg0: i32, %arg1: i32) -> (i32, i32) {
    %c0_i32 = arith.constant 0 : i32
    %c0_i32_0 = arith.constant 0 : i32
    %c0_i32_1 = arith.constant 0 : i32
    return %c0_i32, %c0_i32_0 : i32, i32
  }
  func.func @transform_3(%arg0: i32, %arg1: i32) -> (i32, i32) {
    %c0_i32 = arith.constant 0 : i32
    %c0_i32_0 = arith.constant 0 : i32
    %c0_i32_1 = arith.constant 0 : i32
    return %c0_i32, %c0_i32_0 : i32, i32
  }
  func.func @transform_4(%arg0: i32, %arg1: i32) -> (i32, i32) {
    %c0_i32 = arith.constant 0 : i32
    %c0_i32_0 = arith.constant 0 : i32
    %c0_i32_1 = arith.constant 0 : i32
    return %c0_i32, %c0_i32_0 : i32, i32
  }
  func.func @transform_5(%arg0: i32, %arg1: i32) -> (i32, i32) {
    %c0_i32 = arith.constant 0 : i32
    %c0_i32_0 = arith.constant 0 : i32
    return %c0_i32, %arg1 : i32, i32
  }
  func.func @transform_6(%arg0: i32, %arg1: i32) -> (i32, i32) {
    %c0_i32 = arith.constant 0 : i32
    %c0_i32_0 = arith.constant 0 : i32
    return %c0_i32, %arg1 : i32, i32
  }
  func.func @transform_7(%arg0: i32, %arg1: i32) -> (i32, i32) {
    %c0_i32 = arith.constant 0 : i32
    return %arg0, %arg1 : i32, i32
  }
}

module attributes {stable_mosaic.version = 11 : i64} {
  func.func @_lm_kernel(%arg0: i32, %arg1: i32, %arg2: memref<16x256xbf16, #tpu.memory_space<vmem>>, %arg3: memref<256x256xbf16, #tpu.memory_space<vmem>>, %arg4: memref<1x256xf32, #tpu.memory_space<vmem>>, %arg5: memref<256x256xbf16, #tpu.memory_space<vmem>>, %arg6: memref<1x256xf32, #tpu.memory_space<vmem>>, %arg7: memref<256x256xbf16, #tpu.memory_space<vmem>>, %arg8: memref<1x256xf32, #tpu.memory_space<vmem>>, %arg9: memref<16x256xf32, #tpu.memory_space<vmem>>, %arg10: memref<16x256xbf16, #tpu.memory_space<vmem>>) attributes {dimension_semantics = [#tpu.dimension_semantics<parallel>, #tpu.dimension_semantics<arbitrary>], iteration_bounds = array<i64: 1, 1>, scalar_prefetch = 0 : i64, scratch_operands = 1 : i64, tpu.core_type = #tpu.core_type<tc>, window_params = [{transform_indices = @transform_0, window_bounds = array<i64: 16, 256>}, {pipeline_mode = #tpu.pipeline_mode<synchronous>, transform_indices = @transform_1, window_bounds = array<i64: 256, 256>}, {pipeline_mode = #tpu.pipeline_mode<synchronous>, transform_indices = @transform_2, window_bounds = array<i64: 1, 256>}, {pipeline_mode = #tpu.pipeline_mode<synchronous>, transform_indices = @transform_3, window_bounds = array<i64: 256, 256>}, {pipeline_mode = #tpu.pipeline_mode<synchronous>, transform_indices = @transform_4, window_bounds = array<i64: 1, 256>}, {transform_indices = @transform_5, window_bounds = array<i64: 256, 256>}, {transform_indices = @transform_6, window_bounds = array<i64: 1, 256>}, {transform_indices = @transform_7, window_bounds = array<i64: 16, 256>}]} {
    %c0_i32 = arith.constant 0 : i32
    %0 = arith.cmpi eq, %arg1, %c0_i32 : i32
    %1 = arith.extui %0 : i1 to i32
    %c0_i32_0 = arith.constant 0 : i32
    %2 = arith.cmpi ne, %1, %c0_i32_0 : i32
    scf.if %2 {
      %c0_8 = arith.constant 0 : index
      %c0_9 = arith.constant 0 : index
      %10 = vector.load %arg2[%c0_8, %c0_9] : memref<16x256xbf16, #tpu.memory_space<vmem>>, vector<16x256xbf16>
      %c0_10 = arith.constant 0 : index
      %c0_11 = arith.constant 0 : index
      %11 = vector.load %arg3[%c0_10, %c0_11] : memref<256x256xbf16, #tpu.memory_space<vmem>>, vector<256x256xbf16>
      %cst_12 = arith.constant dense<0.000000e+00> : vector<16x256xf32>
      %12 = tpu.matmul %10, %11, %cst_12 {dimension_numbers = #tpu.dot_dimension_numbers<[1], [0], [0], [1], [0, 0, 1, 1], [], []>} : vector<16x256xbf16>, vector<256x256xbf16>, vector<16x256xf32> -> vector<16x256xf32>
      %c0_13 = arith.constant 0 : index
      %c0_14 = arith.constant 0 : index
      %13 = vector.load %arg4[%c0_13, %c0_14] : memref<1x256xf32, #tpu.memory_space<vmem>>, vector<1x256xf32>
      %14 = vector.broadcast %13 : vector<1x256xf32> to vector<16x256xf32>
      %15 = arith.addf %12, %14 : vector<16x256xf32>
      %16 = math.tanh %15 : vector<16x256xf32>
      %17 = arith.truncf %16 : vector<16x256xf32> to vector<16x256xbf16>
      %c0_15 = arith.constant 0 : index
      %c0_16 = arith.constant 0 : index
      %18 = vector.load %arg5[%c0_15, %c0_16] : memref<256x256xbf16, #tpu.memory_space<vmem>>, vector<256x256xbf16>
      %cst_17 = arith.constant dense<0.000000e+00> : vector<16x256xf32>
      %19 = tpu.matmul %17, %18, %cst_17 {dimension_numbers = #tpu.dot_dimension_numbers<[1], [0], [0], [1], [0, 0, 1, 1], [], []>} : vector<16x256xbf16>, vector<256x256xbf16>, vector<16x256xf32> -> vector<16x256xf32>
      %c0_18 = arith.constant 0 : index
      %c0_19 = arith.constant 0 : index
      %20 = vector.load %arg6[%c0_18, %c0_19] : memref<1x256xf32, #tpu.memory_space<vmem>>, vector<1x256xf32>
      %21 = vector.broadcast %20 : vector<1x256xf32> to vector<16x256xf32>
      %22 = arith.addf %19, %21 : vector<16x256xf32>
      %23 = math.tanh %22 : vector<16x256xf32>
      %24 = arith.truncf %23 : vector<16x256xf32> to vector<16x256xbf16>
      %c0_20 = arith.constant 0 : index
      %c0_21 = arith.constant 0 : index
      %25 = vector.load %arg10[%c0_20, %c0_21] : memref<16x256xbf16, #tpu.memory_space<vmem>>, vector<16x256xbf16>
      tpu.vector_store %arg10[%c0_20, %c0_21], %24 {strides = array<i32>} : memref<16x256xbf16, #tpu.memory_space<vmem>>, vector<16x256xbf16>,
    } else {
    }
    %c0 = arith.constant 0 : index
    %c0_1 = arith.constant 0 : index
    %3 = vector.load %arg10[%c0, %c0_1] : memref<16x256xbf16, #tpu.memory_space<vmem>>, vector<16x256xbf16>
    %c0_2 = arith.constant 0 : index
    %c0_3 = arith.constant 0 : index
    %4 = vector.load %arg7[%c0_2, %c0_3] : memref<256x256xbf16, #tpu.memory_space<vmem>>, vector<256x256xbf16>
    %cst = arith.constant dense<0.000000e+00> : vector<16x256xf32>
    %5 = tpu.matmul %3, %4, %cst {dimension_numbers = #tpu.dot_dimension_numbers<[1], [0], [0], [1], [0, 0, 1, 1], [], []>} : vector<16x256xbf16>, vector<256x256xbf16>, vector<16x256xf32> -> vector<16x256xf32>
    %c0_4 = arith.constant 0 : index
    %c0_5 = arith.constant 0 : index
    %6 = vector.load %arg8[%c0_4, %c0_5] : memref<1x256xf32, #tpu.memory_space<vmem>>, vector<1x256xf32>
    %7 = vector.broadcast %6 : vector<1x256xf32> to vector<16x256xf32>
    %8 = arith.addf %5, %7 : vector<16x256xf32>
    %c0_6 = arith.constant 0 : index
    %c0_7 = arith.constant 0 : index
    %9 = vector.load %arg9[%c0_6, %c0_7] : memref<16x256xf32, #tpu.memory_space<vmem>>, vector<16x256xf32>
    tpu.vector_store %arg9[%c0_6, %c0_7], %8 {strides = array<i32>} : memref<16x256xf32, #tpu.memory_space<vmem>>, vector<16x256xf32>,
    return
  }
  func.func @transform_0(%arg0: i32, %arg1: i32) -> (i32, i32) {
    %c0_i32 = arith.constant 0 : i32
    %c0_i32_0 = arith.constant 0 : i32
    return %arg0, %c0_i32 : i32, i32
  }
  func.func @transform_1(%arg0: i32, %arg1: i32) -> (i32, i32) {
    %c0_i32 = arith.constant 0 : i32
    %c0_i32_0 = arith.constant 0 : i32
    %c0_i32_1 = arith.constant 0 : i32
    return %c0_i32, %c0_i32_0 : i32, i32
  }
  func.func @transform_2(%arg0: i32, %arg1: i32) -> (i32, i32) {
    %c0_i32 = arith.constant 0 : i32
    %c0_i32_0 = arith.constant 0 : i32
    %c0_i32_1 = arith.constant 0 : i32
    return %c0_i32, %c0_i32_0 : i32, i32
  }
  func.func @transform_3(%arg0: i32, %arg1: i32) -> (i32, i32) {
    %c0_i32 = arith.constant 0 : i32
    %c0_i32_0 = arith.constant 0 : i32
    %c0_i32_1 = arith.constant 0 : i32
    return %c0_i32, %c0_i32_0 : i32, i32
  }
  func.func @transform_4(%arg0: i32, %arg1: i32) -> (i32, i32) {
    %c0_i32 = arith.constant 0 : i32
    %c0_i32_0 = arith.constant 0 : i32
    %c0_i32_1 = arith.constant 0 : i32
    return %c0_i32, %c0_i32_0 : i32, i32
  }
  func.func @transform_5(%arg0: i32, %arg1: i32) -> (i32, i32) {
    %c0_i32 = arith.constant 0 : i32
    %c0_i32_0 = arith.constant 0 : i32
    return %c0_i32, %arg1 : i32, i32
  }
  func.func @transform_6(%arg0: i32, %arg1: i32) -> (i32, i32) {
    %c0_i32 = arith.constant 0 : i32
    %c0_i32_0 = arith.constant 0 : i32
    return %c0_i32, %arg1 : i32, i32
  }
  func.func @transform_7(%arg0: i32, %arg1: i32) -> (i32, i32) {
    %c0_i32 = arith.constant 0 : i32
    return %arg0, %arg1 : i32, i32
  }
}

</mosaic_0001>

<llo_original>
// kernel: language_model_forward.1
$region0: #{language_model_forward.1}
  #allocation0 [shape = 'u32[]', space=smem, size = 0x4, offset = 0x4, fixed_abs, tag = 'smem constant byte address 0x4 - core index']
  #allocation1 [shape = 'u32[144,128]{1,0:T(1,128)}', space=vmem, size = 0x12000, scoped, tag = 'internal scratch']
  #allocation2 [shape = 'bf16[16,256]{1,0:T(16,128)(2,1)}', space=vmem, size = 0x2000, scoped, tag = 'scratch operand']
  %s0 = inlined_call_operand.vmem [shape: bf16[16,256], index: 0, kind: input, shape index: {}]
  %s1 = inlined_call_operand.vmem [shape: bf16[256,256], index: 1, kind: input, shape index: {}]
  %s2 = inlined_call_operand.vmem [shape: f32[1,256], index: 2, kind: input, shape index: {}]
  %s3 = inlined_call_operand.hbm [shape: bf16[256,256], index: 3, kind: input, shape index: {}]
  %s4 = inlined_call_operand.vmem [shape: f32[1,256], index: 4, kind: input, shape index: {}]
  %s5 = inlined_call_operand.hbm [shape: bf16[256,256], index: 5, kind: input, shape index: {}]
  %s6 = inlined_call_operand.vmem [shape: f32[1,256], index: 6, kind: input, shape index: {}]
  %s7 = inlined_call_operand.vmem [shape: f32[16,256], index: 7, kind: output, shape index: {}]
  %s8 = sld [smem:[#allocation0]]
  $region50: #{language_model_forward.1} parent=0
    _
  %s10 = ssub.s32 1, %s8
  %s11 = scalar_select 0, %s10, %s8
  $region1: #{language_model_forward.1} parent=0
    #allocation3 [shape = 'u8[131072]{0}', space=vmem, size = 0x20000, scoped, tag = 'input window, operand 3, single buffered']
    #allocation4 [shape = 's32[1]{0}', space=sflag, size = 0x4, scoped, tag = 'scoped memory for language_model_forward.1']
    #allocation5 [shape = 'u8[131072]{0}', space=vmem, size = 0x20000, scoped, tag = 'input window, operand 5, single buffered']
    #allocation6 [shape = 's32[1]{0}', space=sflag, size = 0x4, scoped, tag = 'scoped memory for language_model_forward.1']
    %12 = vsyncpa [#allocation4], 0
    %13 = vsyncpa [#allocation6], 0
    // Predicated region
    $region2: #{language_model_forward.1} parent=1 // pred_check
      _
    $region3: #{language_model_forward.1} parent=1 // pred_check_branch
      %15 = sbr.rel (0) target = $region5
    $region4: #{language_model_forward.1} parent=1 // pred_region
      _
    $region5: #{language_model_forward.1} parent=1 // pred_fallthru
      _
    // Predicated region
    $region6: #{language_model_forward.1} parent=1 // pred_check
      _
    $region7: #{language_model_forward.1} parent=1 // pred_check_branch
      %17 = sbr.rel (0) target = $region9
    $region8: #{language_model_forward.1} parent=1 // pred_region
      _
    $region9: #{language_model_forward.1} parent=1 // pred_fallthru
      _
    // Predicated region
    $region10: #{language_model_forward.1} parent=1 // pred_check
      _
    $region11: #{language_model_forward.1} parent=1 // pred_check_branch
      %19 = sbr.rel (0) target = $region13
    $region12: #{language_model_forward.1} parent=1 // pred_region
      _
    $region13: #{language_model_forward.1} parent=1 // pred_fallthru
      _
    // Predicated region
    $region14: #{language_model_forward.1} parent=1 // pred_check
      _
    $region15: #{language_model_forward.1} parent=1 // pred_check_branch
      %21 = sbr.rel (0) target = $region17
    $region16: #{language_model_forward.1} parent=1 // pred_region
      %s23 = ssub.s32 4096, 4096
      %24 = vsyncadd [#allocation4], %s23
      %s25 = sshll.u32 [#allocation3], 4
      %s26 = int_to_ptr.vmem [resolvable:$true] %s25
      %31 = dma.hbm_to_vmem [thread:$0]  %s3, 4096, %s26, [#allocation4], 128, 128, 8
    $region17: #{language_model_forward.1} parent=1 // pred_fallthru
      _
    // Predicated region
    $region18: #{language_model_forward.1} parent=1 // pred_check
      _
    $region19: #{language_model_forward.1} parent=1 // pred_check_branch
      %33 = sbr.rel (0) target = $region21
    $region20: #{language_model_forward.1} parent=1 // pred_region
      _
    $region21: #{language_model_forward.1} parent=1 // pred_fallthru
      _
    // Predicated region
    $region22: #{language_model_forward.1} parent=1 // pred_check
      _
    $region23: #{language_model_forward.1} parent=1 // pred_check_branch
      %35 = sbr.rel (0) target = $region25
    $region24: #{language_model_forward.1} parent=1 // pred_region
      %s37 = ssub.s32 4096, 4096
      %38 = vsyncadd [#allocation6], %s37
      %s39 = sshll.u32 [#allocation5], 4
      %s40 = int_to_ptr.vmem [resolvable:$true] %s39
      %45 = dma.hbm_to_vmem [thread:$0]  %s5, 4096, %s40, [#allocation6], 128, 128, 8
    $region25: #{language_model_forward.1} parent=1 // pred_fallthru
      _
    // Predicated region
    $region26: #{language_model_forward.1} parent=1 // pred_check
      _
    $region27: #{language_model_forward.1} parent=1 // pred_check_branch
      %47 = sbr.rel (0) target = $region29
    $region28: #{language_model_forward.1} parent=1 // pred_region
      _
    $region29: #{language_model_forward.1} parent=1 // pred_fallthru
      _
    // Predicated region
    $region30: #{language_model_forward.1} parent=1 // pred_check
      _
    $region31: #{language_model_forward.1} parent=1 // pred_check_branch
      %49 = sbr.rel (0) target = $region33
    $region32: #{language_model_forward.1} parent=1 // pred_region
      %50 = dma.done [#allocation4], 4096
    $region33: #{language_model_forward.1} parent=1 // pred_fallthru
      _
    // Predicated region
    $region34: #{language_model_forward.1} parent=1 // pred_check
      _
    $region35: #{language_model_forward.1} parent=1 // pred_check_branch
      %52 = sbr.rel (0) target = $region37
    $region36: #{language_model_forward.1} parent=1 // pred_region
      %53 = dma.done [#allocation6], 4096
    $region37: #{language_model_forward.1} parent=1 // pred_fallthru
      _
    %p54 = scmp.eq.s32.totalorder 0, 0
    // Predicated region
    $region38: #{language_model_forward.1} parent=1 // pred_check
      %p55 = pneg %p54
    $region39: #{language_model_forward.1} parent=1 // pred_check_branch
      %57 = sbr.rel (%p55) target = $region41
    $region40: #{language_model_forward.1} parent=1 // pred_region
      %v58 = vld [vmem:[%s0] sm:$0xff]
      %v59 = vld [vmem:[%s0 + $0x8] sm:$0xff]
      %v60 = vld [vmem:[%s1] sm:$0xff]
      %v61 = vld [vmem:[%s1 + $0x8] sm:$0xff]
      %v62 = vld [vmem:[%s1 + $0x10] sm:$0xff]
      %v63 = vld [vmem:[%s1 + $0x18] sm:$0xff]
      %v64 = vld [vmem:[%s1 + $0x20] sm:$0xff]
      %v65 = vld [vmem:[%s1 + $0x28] sm:$0xff]
      %v66 = vld [vmem:[%s1 + $0x30] sm:$0xff]
      %v67 = vld [vmem:[%s1 + $0x38] sm:$0xff]
      %v68 = vld [vmem:[%s1 + $0x40] sm:$0xff]
      %v69 = vld [vmem:[%s1 + $0x48] sm:$0xff]
      %v70 = vld [vmem:[%s1 + $0x50] sm:$0xff]
      %v71 = vld [vmem:[%s1 + $0x58] sm:$0xff]
      %v72 = vld [vmem:[%s1 + $0x60] sm:$0xff]
      %v73 = vld [vmem:[%s1 + $0x68] sm:$0xff]
      %v74 = vld [vmem:[%s1 + $0x70] sm:$0xff]
      %v75 = vld [vmem:[%s1 + $0x78] sm:$0xff]
      %v76 = vld [vmem:[%s1 + $0x80] sm:$0xff]
      %v77 = vld [vmem:[%s1 + $0x88] sm:$0xff]
      %v78 = vld [vmem:[%s1 + $0x90] sm:$0xff]
      %v79 = vld [vmem:[%s1 + $0x98] sm:$0xff]
      %v80 = vld [vmem:[%s1 + $0xa0] sm:$0xff]
      %v81 = vld [vmem:[%s1 + $0xa8] sm:$0xff]
      %v82 = vld [vmem:[%s1 + $0xb0] sm:$0xff]
      %v83 = vld [vmem:[%s1 + $0xb8] sm:$0xff]
      %v84 = vld [vmem:[%s1 + $0xc0] sm:$0xff]
      %v85 = vld [vmem:[%s1 + $0xc8] sm:$0xff]
      %v86 = vld [vmem:[%s1 + $0xd0] sm:$0xff]
      %v87 = vld [vmem:[%s1 + $0xd8] sm:$0xff]
      %v88 = vld [vmem:[%s1 + $0xe0] sm:$0xff]
      %v89 = vld [vmem:[%s1 + $0xe8] sm:$0xff]
      %v90 = vld [vmem:[%s1 + $0xf0] sm:$0xff]
      %v91 = vld [vmem:[%s1 + $0xf8] sm:$0xff]
      %v92 = vld [vmem:[%s2] sm:$0x3]
      %v94 = vlaneseq
      %v95 = vshrl.u32 %v94, 7
      %v96 = vsub.s32 0, %v95
      %v97 = vrot.slane %v92, %v96
      %v98 = vlaneseq
      %v99 = vshrl.u32 %v98, 7
      %v100 = vsub.s32 1, %v99
      %v101 = vrot.slane %v92, %v100
      %v106 = vunpack.c.l.b16 %v58
      %v107 = vunpack.c.h.b16 %v58
      %v108 = vunpack.c.l.b16 %v59
      %v109 = vunpack.c.h.b16 %v59
      %v110 = vpack.c.b16 %v108, %v106
      %v111 = vpack.c.b16 %v109, %v107
      %v146 = vunpack.c.l.b16 %v60
      %v147 = vunpack.c.h.b16 %v60
      %v148 = vunpack.c.l.b16 %v61
      %v149 = vunpack.c.h.b16 %v61
      %v150 = vunpack.c.l.b16 %v62
      %v151 = vunpack.c.h.b16 %v62
      %v152 = vunpack.c.l.b16 %v63
      %v153 = vunpack.c.h.b16 %v63
      %v154 = vunpack.c.l.b16 %v64
      %v155 = vunpack.c.h.b16 %v64
      %v156 = vunpack.c.l.b16 %v65
      %v157 = vunpack.c.h.b16 %v65
      %v158 = vunpack.c.l.b16 %v66
      %v159 = vunpack.c.h.b16 %v66
      %v160 = vunpack.c.l.b16 %v67
      %v161 = vunpack.c.h.b16 %v67
      %v162 = vunpack.c.l.b16 %v68
      %v163 = vunpack.c.h.b16 %v68
      %v164 = vunpack.c.l.b16 %v69
      %v165 = vunpack.c.h.b16 %v69
      %v166 = vunpack.c.l.b16 %v70
      %v167 = vunpack.c.h.b16 %v70
      %v168 = vunpack.c.l.b16 %v71
      %v169 = vunpack.c.h.b16 %v71
      %v170 = vunpack.c.l.b16 %v72
      %v171 = vunpack.c.h.b16 %v72
      %v172 = vunpack.c.l.b16 %v73
      %v173 = vunpack.c.h.b16 %v73
      %v174 = vunpack.c.l.b16 %v74
      %v175 = vunpack.c.h.b16 %v74
      %v176 = vunpack.c.l.b16 %v75
      %v177 = vunpack.c.h.b16 %v75
      %v178 = vunpack.c.l.b16 %v76
      %v179 = vunpack.c.h.b16 %v76
      %v180 = vunpack.c.l.b16 %v77
      %v181 = vunpack.c.h.b16 %v77
      %v182 = vunpack.c.l.b16 %v78
      %v183 = vunpack.c.h.b16 %v78
      %v184 = vunpack.c.l.b16 %v79
      %v185 = vunpack.c.h.b16 %v79
      %v186 = vunpack.c.l.b16 %v80
      %v187 = vunpack.c.h.b16 %v80
      %v188 = vunpack.c.l.b16 %v81
      %v189 = vunpack.c.h.b16 %v81
      %v190 = vunpack.c.l.b16 %v82
      %v191 = vunpack.c.h.b16 %v82
      %v192 = vunpack.c.l.b16 %v83
      %v193 = vunpack.c.h.b16 %v83
      %v194 = vunpack.c.l.b16 %v84
      %v195 = vunpack.c.h.b16 %v84
      %v196 = vunpack.c.l.b16 %v85
      %v197 = vunpack.c.h.b16 %v85
      %v198 = vunpack.c.l.b16 %v86
      %v199 = vunpack.c.h.b16 %v86
      %v200 = vunpack.c.l.b16 %v87
      %v201 = vunpack.c.h.b16 %v87
      %v202 = vunpack.c.l.b16 %v88
      %v203 = vunpack.c.h.b16 %v88
      %v204 = vunpack.c.l.b16 %v89
      %v205 = vunpack.c.h.b16 %v89
      %v206 = vunpack.c.l.b16 %v90
      %v207 = vunpack.c.h.b16 %v90
      %v208 = vunpack.c.l.b16 %v91
      %v209 = vunpack.c.h.b16 %v91
      %v210 = vpack.c.b16 %v148, %v146
      %v211 = vpack.c.b16 %v149, %v147
      %v212 = vpack.c.b16 %v152, %v150
      %v213 = vpack.c.b16 %v153, %v151
      %v214 = vpack.c.b16 %v156, %v154
      %v215 = vpack.c.b16 %v157, %v155
      %v216 = vpack.c.b16 %v160, %v158
      %v217 = vpack.c.b16 %v161, %v159
      %v218 = vpack.c.b16 %v164, %v162
      %v219 = vpack.c.b16 %v165, %v163
      %v220 = vpack.c.b16 %v168, %v166
      %v221 = vpack.c.b16 %v169, %v167
      %v222 = vpack.c.b16 %v172, %v170
      %v223 = vpack.c.b16 %v173, %v171
      %v224 = vpack.c.b16 %v176, %v174
      %v225 = vpack.c.b16 %v177, %v175
      %v226 = vpack.c.b16 %v180, %v178
      %v227 = vpack.c.b16 %v181, %v179
      %v228 = vpack.c.b16 %v184, %v182
      %v229 = vpack.c.b16 %v185, %v183
      %v230 = vpack.c.b16 %v188, %v186
      %v231 = vpack.c.b16 %v189, %v187
      %v232 = vpack.c.b16 %v192, %v190
      %v233 = vpack.c.b16 %v193, %v191
      %v234 = vpack.c.b16 %v196, %v194
      %v235 = vpack.c.b16 %v197, %v195
      %v236 = vpack.c.b16 %v200, %v198
      %v237 = vpack.c.b16 %v201, %v199
      %v238 = vpack.c.b16 %v204, %v202
      %v239 = vpack.c.b16 %v205, %v203
      %v240 = vpack.c.b16 %v208, %v206
      %v241 = vpack.c.b16 %v209, %v207
      %274 = vmatprep.subr.bf16.mxu0 %v211
      %275 = vmatpush1.bf16.msra.mxu0 %v210
      %276 = vmatprep.subr.bf16.mxu0 %v213
      %277 = vmatpush1.bf16.msra.mxu0 %v212
      %278 = vmatprep.subr.bf16.mxu0 %v215
      %279 = vmatpush1.bf16.msra.mxu0 %v214
      %280 = vmatprep.subr.bf16.mxu0 %v217
      %281 = vmatpush1.bf16.msra.mxu0 %v216
      %282 = vmatprep.subr.bf16.mxu0 %v219
      %283 = vmatpush1.bf16.msra.mxu0 %v218
      %284 = vmatprep.subr.bf16.mxu0 %v221
      %285 = vmatpush1.bf16.msra.mxu0 %v220
      %286 = vmatprep.subr.bf16.mxu0 %v223
      %287 = vmatpush1.bf16.msra.mxu0 %v222
      %288 = vmatprep.subr.bf16.mxu0 %v225
      %289 = vmatpush1.bf16.msra.mxu0 %v224
      %290 = vmatprep.subr.bf16.mxu0 %v227
      %291 = vmatpush1.bf16.msra.mxu0 %v226
      %292 = vmatprep.subr.bf16.mxu0 %v229
      %293 = vmatpush1.bf16.msra.mxu0 %v228
      %294 = vmatprep.subr.bf16.mxu0 %v231
      %295 = vmatpush1.bf16.msra.mxu0 %v230
      %296 = vmatprep.subr.bf16.mxu0 %v233
      %297 = vmatpush1.bf16.msra.mxu0 %v232
      %298 = vmatprep.subr.bf16.mxu0 %v235
      %299 = vmatpush1.bf16.msra.mxu0 %v234
      %300 = vmatprep.subr.bf16.mxu0 %v237
      %301 = vmatpush1.bf16.msra.mxu0 %v236
      %302 = vmatprep.subr.bf16.mxu0 %v239
      %303 = vmatpush1.bf16.msra.mxu0 %v238
      %304 = vmatprep.subr.bf16.mxu0 %v241
      %305 = vmatpush1.bf16.msra.mxu0 %v240
      %306 = vmatprep.mubr.bf16.mxu0 %v111
      %307 = vmatmul.mubr.bf16.gmra.mrb[0].mxu0 %v110
      %v308 = vpop.f32.mrb[0].mxu0
      %v309 = vadd.f32 %v97, %v308
      %v310 = vpop.f32.mrb[0].mxu0
      %v311 = vadd.f32 %v101, %v310
      %v312 = vpop.f32.mrb[0].mxu0
      %v313 = vadd.f32 %v97, %v312
      %v314 = vpop.f32.mrb[0].mxu0
      %v315 = vadd.f32 %v101, %v314
      %316 = vdwg.mxu0
      %v317 = vtanh.pop %v309
      %v318 = vtanh.pop %v311
      %v319 = vtanh.pop %v313
      %v320 = vtanh.pop %v315
      %v321 = vpack.c.bf16 %v319, %v317
      %v322 = vpack.c.bf16 %v320, %v318
      %v323 = vld [vmem:[#allocation3] sm:$0xff]
      %v324 = vld [vmem:[#allocation3 + $0x8] sm:$0xff]
      %v325 = vld [vmem:[#allocation3 + $0x10] sm:$0xff]
      %v326 = vld [vmem:[#allocation3 + $0x18] sm:$0xff]
      %v327 = vld [vmem:[#allocation3 + $0x20] sm:$0xff]
      %v328 = vld [vmem:[#allocation3 + $0x28] sm:$0xff]
      %v329 = vld [vmem:[#allocation3 + $0x30] sm:$0xff]
      %v330 = vld [vmem:[#allocation3 + $0x38] sm:$0xff]
      %v331 = vld [vmem:[#allocation3 + $0x40] sm:$0xff]
      %v332 = vld [vmem:[#allocation3 + $0x48] sm:$0xff]
      %v333 = vld [vmem:[#allocation3 + $0x50] sm:$0xff]
      %v334 = vld [vmem:[#allocation3 + $0x58] sm:$0xff]
      %v335 = vld [vmem:[#allocation3 + $0x60] sm:$0xff]
      %v336 = vld [vmem:[#allocation3 + $0x68] sm:$0xff]
      %v337 = vld [vmem:[#allocation3 + $0x70] sm:$0xff]
      %v338 = vld [vmem:[#allocation3 + $0x78] sm:$0xff]
      %v339 = vld [vmem:[#allocation3 + $0x80] sm:$0xff]
      %v340 = vld [vmem:[#allocation3 + $0x88] sm:$0xff]
      %v341 = vld [vmem:[#allocation3 + $0x90] sm:$0xff]
      %v342 = vld [vmem:[#allocation3 + $0x98] sm:$0xff]
      %v343 = vld [vmem:[#allocation3 + $0xa0] sm:$0xff]
      %v344 = vld [vmem:[#allocation3 + $0xa8] sm:$0xff]
      %v345 = vld [vmem:[#allocation3 + $0xb0] sm:$0xff]
      %v346 = vld [vmem:[#allocation3 + $0xb8] sm:$0xff]
      %v347 = vld [vmem:[#allocation3 + $0xc0] sm:$0xff]
      %v348 = vld [vmem:[#allocation3 + $0xc8] sm:$0xff]
      %v349 = vld [vmem:[#allocation3 + $0xd0] sm:$0xff]
      %v350 = vld [vmem:[#allocation3 + $0xd8] sm:$0xff]
      %v351 = vld [vmem:[#allocation3 + $0xe0] sm:$0xff]
      %v352 = vld [vmem:[#allocation3 + $0xe8] sm:$0xff]
      %v353 = vld [vmem:[#allocation3 + $0xf0] sm:$0xff]
      %v354 = vld [vmem:[#allocation3 + $0xf8] sm:$0xff]
      %v355 = vld [vmem:[%s4] sm:$0x3]
      %v357 = vlaneseq
      %v358 = vshrl.u32 %v357, 7
      %v359 = vsub.s32 0, %v358
      %v360 = vrot.slane %v355, %v359
      %v361 = vlaneseq
      %v362 = vshrl.u32 %v361, 7
      %v363 = vsub.s32 1, %v362
      %v364 = vrot.slane %v355, %v363
      %v399 = vunpack.c.l.b16 %v323
      %v400 = vunpack.c.h.b16 %v323
      %v401 = vunpack.c.l.b16 %v324
      %v402 = vunpack.c.h.b16 %v324
      %v403 = vunpack.c.l.b16 %v325
      %v404 = vunpack.c.h.b16 %v325
      %v405 = vunpack.c.l.b16 %v326
      %v406 = vunpack.c.h.b16 %v326
      %v407 = vunpack.c.l.b16 %v327
      %v408 = vunpack.c.h.b16 %v327
      %v409 = vunpack.c.l.b16 %v328
      %v410 = vunpack.c.h.b16 %v328
      %v411 = vunpack.c.l.b16 %v329
      %v412 = vunpack.c.h.b16 %v329
      %v413 = vunpack.c.l.b16 %v330
      %v414 = vunpack.c.h.b16 %v330
      %v415 = vunpack.c.l.b16 %v331
      %v416 = vunpack.c.h.b16 %v331
      %v417 = vunpack.c.l.b16 %v332
      %v418 = vunpack.c.h.b16 %v332
      %v419 = vunpack.c.l.b16 %v333
      %v420 = vunpack.c.h.b16 %v333
      %v421 = vunpack.c.l.b16 %v334
      %v422 = vunpack.c.h.b16 %v334
      %v423 = vunpack.c.l.b16 %v335
      %v424 = vunpack.c.h.b16 %v335
      %v425 = vunpack.c.l.b16 %v336
      %v426 = vunpack.c.h.b16 %v336
      %v427 = vunpack.c.l.b16 %v337
      %v428 = vunpack.c.h.b16 %v337
      %v429 = vunpack.c.l.b16 %v338
      %v430 = vunpack.c.h.b16 %v338
      %v431 = vunpack.c.l.b16 %v339
      %v432 = vunpack.c.h.b16 %v339
      %v433 = vunpack.c.l.b16 %v340
      %v434 = vunpack.c.h.b16 %v340
      %v435 = vunpack.c.l.b16 %v341
      %v436 = vunpack.c.h.b16 %v341
      %v437 = vunpack.c.l.b16 %v342
      %v438 = vunpack.c.h.b16 %v342
      %v439 = vunpack.c.l.b16 %v343
      %v440 = vunpack.c.h.b16 %v343
      %v441 = vunpack.c.l.b16 %v344
      %v442 = vunpack.c.h.b16 %v344
      %v443 = vunpack.c.l.b16 %v345
      %v444 = vunpack.c.h.b16 %v345
      %v445 = vunpack.c.l.b16 %v346
      %v446 = vunpack.c.h.b16 %v346
      %v447 = vunpack.c.l.b16 %v347
      %v448 = vunpack.c.h.b16 %v347
      %v449 = vunpack.c.l.b16 %v348
      %v450 = vunpack.c.h.b16 %v348
      %v451 = vunpack.c.l.b16 %v349
      %v452 = vunpack.c.h.b16 %v349
      %v453 = vunpack.c.l.b16 %v350
      %v454 = vunpack.c.h.b16 %v350
      %v455 = vunpack.c.l.b16 %v351
      %v456 = vunpack.c.h.b16 %v351
      %v457 = vunpack.c.l.b16 %v352
      %v458 = vunpack.c.h.b16 %v352
      %v459 = vunpack.c.l.b16 %v353
      %v460 = vunpack.c.h.b16 %v353
      %v461 = vunpack.c.l.b16 %v354
      %v462 = vunpack.c.h.b16 %v354
      %v463 = vpack.c.b16 %v401, %v399
      %v464 = vpack.c.b16 %v402, %v400
      %v465 = vpack.c.b16 %v405, %v403
      %v466 = vpack.c.b16 %v406, %v404
      %v467 = vpack.c.b16 %v409, %v407
      %v468 = vpack.c.b16 %v410, %v408
      %v469 = vpack.c.b16 %v413, %v411
      %v470 = vpack.c.b16 %v414, %v412
      %v471 = vpack.c.b16 %v417, %v415
      %v472 = vpack.c.b16 %v418, %v416
      %v473 = vpack.c.b16 %v421, %v419
      %v474 = vpack.c.b16 %v422, %v420
      %v475 = vpack.c.b16 %v425, %v423
      %v476 = vpack.c.b16 %v426, %v424
      %v477 = vpack.c.b16 %v429, %v427
      %v478 = vpack.c.b16 %v430, %v428
      %v479 = vpack.c.b16 %v433, %v431
      %v480 = vpack.c.b16 %v434, %v432
      %v481 = vpack.c.b16 %v437, %v435
      %v482 = vpack.c.b16 %v438, %v436
      %v483 = vpack.c.b16 %v441, %v439
      %v484 = vpack.c.b16 %v442, %v440
      %v485 = vpack.c.b16 %v445, %v443
      %v486 = vpack.c.b16 %v446, %v444
      %v487 = vpack.c.b16 %v449, %v447
      %v488 = vpack.c.b16 %v450, %v448
      %v489 = vpack.c.b16 %v453, %v451
      %v490 = vpack.c.b16 %v454, %v452
      %v491 = vpack.c.b16 %v457, %v455
      %v492 = vpack.c.b16 %v458, %v456
      %v493 = vpack.c.b16 %v461, %v459
      %v494 = vpack.c.b16 %v462, %v460
      %527 = vmatprep.subr.bf16.mxu0 %v464
      %528 = vmatpush1.bf16.msra.mxu0 %v463
      %529 = vmatprep.subr.bf16.mxu0 %v466
      %530 = vmatpush1.bf16.msra.mxu0 %v465
      %531 = vmatprep.subr.bf16.mxu0 %v468
      %532 = vmatpush1.bf16.msra.mxu0 %v467
      %533 = vmatprep.subr.bf16.mxu0 %v470
      %534 = vmatpush1.bf16.msra.mxu0 %v469
      %535 = vmatprep.subr.bf16.mxu0 %v472
      %536 = vmatpush1.bf16.msra.mxu0 %v471
      %537 = vmatprep.subr.bf16.mxu0 %v474
      %538 = vmatpush1.bf16.msra.mxu0 %v473
      %539 = vmatprep.subr.bf16.mxu0 %v476
      %540 = vmatpush1.bf16.msra.mxu0 %v475
      %541 = vmatprep.subr.bf16.mxu0 %v478
      %542 = vmatpush1.bf16.msra.mxu0 %v477
      %543 = vmatprep.subr.bf16.mxu0 %v480
      %544 = vmatpush1.bf16.msra.mxu0 %v479
      %545 = vmatprep.subr.bf16.mxu0 %v482
      %546 = vmatpush1.bf16.msra.mxu0 %v481
      %547 = vmatprep.subr.bf16.mxu0 %v484
      %548 = vmatpush1.bf16.msra.mxu0 %v483
      %549 = vmatprep.subr.bf16.mxu0 %v486
      %550 = vmatpush1.bf16.msra.mxu0 %v485
      %551 = vmatprep.subr.bf16.mxu0 %v488
      %552 = vmatpush1.bf16.msra.mxu0 %v487
      %553 = vmatprep.subr.bf16.mxu0 %v490
      %554 = vmatpush1.bf16.msra.mxu0 %v489
      %555 = vmatprep.subr.bf16.mxu0 %v492
      %556 = vmatpush1.bf16.msra.mxu0 %v491
      %557 = vmatprep.subr.bf16.mxu0 %v494
      %558 = vmatpush1.bf16.msra.mxu0 %v493
      %559 = vmatprep.mubr.bf16.mxu0 %v322
      %560 = vmatmul.mubr.bf16.gmra.mrb[0].mxu0 %v321
      %v561 = vpop.f32.mrb[0].mxu0
      %v562 = vadd.f32 %v360, %v561
      %v563 = vpop.f32.mrb[0].mxu0
      %v564 = vadd.f32 %v364, %v563
      %v565 = vpop.f32.mrb[0].mxu0
      %v566 = vadd.f32 %v360, %v565
      %v567 = vpop.f32.mrb[0].mxu0
      %v568 = vadd.f32 %v364, %v567
      %569 = vdwg.mxu0
      %v570 = vtanh.pop %v562
      %v571 = vtanh.pop %v564
      %v572 = vtanh.pop %v566
      %v573 = vtanh.pop %v568
      %v574 = vpack.c.bf16 %v572, %v570
      %v575 = vpack.c.bf16 %v573, %v571
      %576 = vst [vmem:[#allocation2] sm:$0xff] %v574
      %577 = vst [vmem:[#allocation2 + $0x8] sm:$0xff] %v575
    $region41: #{language_model_forward.1} parent=1 // pred_fallthru
      _
    %v578 = vld [vmem:[#allocation2] sm:$0xff]
    %v579 = vld [vmem:[#allocation2 + $0x8] sm:$0xff]
    %v580 = vld [vmem:[#allocation5] sm:$0xff]
    %v581 = vld [vmem:[#allocation5 + $0x8] sm:$0xff]
    %v582 = vld [vmem:[#allocation5 + $0x10] sm:$0xff]
    %v583 = vld [vmem:[#allocation5 + $0x18] sm:$0xff]
    %v584 = vld [vmem:[#allocation5 + $0x20] sm:$0xff]
    %v585 = vld [vmem:[#allocation5 + $0x28] sm:$0xff]
    %v586 = vld [vmem:[#allocation5 + $0x30] sm:$0xff]
    %v587 = vld [vmem:[#allocation5 + $0x38] sm:$0xff]
    %v588 = vld [vmem:[#allocation5 + $0x40] sm:$0xff]
    %v589 = vld [vmem:[#allocation5 + $0x48] sm:$0xff]
    %v590 = vld [vmem:[#allocation5 + $0x50] sm:$0xff]
    %v591 = vld [vmem:[#allocation5 + $0x58] sm:$0xff]
    %v592 = vld [vmem:[#allocation5 + $0x60] sm:$0xff]
    %v593 = vld [vmem:[#allocation5 + $0x68] sm:$0xff]
    %v594 = vld [vmem:[#allocation5 + $0x70] sm:$0xff]
    %v595 = vld [vmem:[#allocation5 + $0x78] sm:$0xff]
    %v596 = vld [vmem:[#allocation5 + $0x80] sm:$0xff]
    %v597 = vld [vmem:[#allocation5 + $0x88] sm:$0xff]
    %v598 = vld [vmem:[#allocation5 + $0x90] sm:$0xff]
    %v599 = vld [vmem:[#allocation5 + $0x98] sm:$0xff]
    %v600 = vld [vmem:[#allocation5 + $0xa0] sm:$0xff]
    %v601 = vld [vmem:[#allocation5 + $0xa8] sm:$0xff]
    %v602 = vld [vmem:[#allocation5 + $0xb0] sm:$0xff]
    %v603 = vld [vmem:[#allocation5 + $0xb8] sm:$0xff]
    %v604 = vld [vmem:[#allocation5 + $0xc0] sm:$0xff]
    %v605 = vld [vmem:[#allocation5 + $0xc8] sm:$0xff]
    %v606 = vld [vmem:[#allocation5 + $0xd0] sm:$0xff]
    %v607 = vld [vmem:[#allocation5 + $0xd8] sm:$0xff]
    %v608 = vld [vmem:[#allocation5 + $0xe0] sm:$0xff]
    %v609 = vld [vmem:[#allocation5 + $0xe8] sm:$0xff]
    %v610 = vld [vmem:[#allocation5 + $0xf0] sm:$0xff]
    %v611 = vld [vmem:[#allocation5 + $0xf8] sm:$0xff]
    %v612 = vld [vmem:[%s6] sm:$0x3]
    %v614 = vlaneseq
    %v615 = vshrl.u32 %v614, 7
    %v616 = vsub.s32 0, %v615
    %v617 = vrot.slane %v612, %v616
    %v618 = vlaneseq
    %v619 = vshrl.u32 %v618, 7
    %v620 = vsub.s32 1, %v619
    %v621 = vrot.slane %v612, %v620
    %v656 = vunpack.c.l.b16 %v580
    %v657 = vunpack.c.h.b16 %v580
    %v658 = vunpack.c.l.b16 %v581
    %v659 = vunpack.c.h.b16 %v581
    %v660 = vunpack.c.l.b16 %v582
    %v661 = vunpack.c.h.b16 %v582
    %v662 = vunpack.c.l.b16 %v583
    %v663 = vunpack.c.h.b16 %v583
    %v664 = vunpack.c.l.b16 %v584
    %v665 = vunpack.c.h.b16 %v584
    %v666 = vunpack.c.l.b16 %v585
    %v667 = vunpack.c.h.b16 %v585
    %v668 = vunpack.c.l.b16 %v586
    %v669 = vunpack.c.h.b16 %v586
    %v670 = vunpack.c.l.b16 %v587
    %v671 = vunpack.c.h.b16 %v587
    %v672 = vunpack.c.l.b16 %v588
    %v673 = vunpack.c.h.b16 %v588
    %v674 = vunpack.c.l.b16 %v589
    %v675 = vunpack.c.h.b16 %v589
    %v676 = vunpack.c.l.b16 %v590
    %v677 = vunpack.c.h.b16 %v590
    %v678 = vunpack.c.l.b16 %v591
    %v679 = vunpack.c.h.b16 %v591
    %v680 = vunpack.c.l.b16 %v592
    %v681 = vunpack.c.h.b16 %v592
    %v682 = vunpack.c.l.b16 %v593
    %v683 = vunpack.c.h.b16 %v593
    %v684 = vunpack.c.l.b16 %v594
    %v685 = vunpack.c.h.b16 %v594
    %v686 = vunpack.c.l.b16 %v595
    %v687 = vunpack.c.h.b16 %v595
    %v688 = vunpack.c.l.b16 %v596
    %v689 = vunpack.c.h.b16 %v596
    %v690 = vunpack.c.l.b16 %v597
    %v691 = vunpack.c.h.b16 %v597
    %v692 = vunpack.c.l.b16 %v598
    %v693 = vunpack.c.h.b16 %v598
    %v694 = vunpack.c.l.b16 %v599
    %v695 = vunpack.c.h.b16 %v599
    %v696 = vunpack.c.l.b16 %v600
    %v697 = vunpack.c.h.b16 %v600
    %v698 = vunpack.c.l.b16 %v601
    %v699 = vunpack.c.h.b16 %v601
    %v700 = vunpack.c.l.b16 %v602
    %v701 = vunpack.c.h.b16 %v602
    %v702 = vunpack.c.l.b16 %v603
    %v703 = vunpack.c.h.b16 %v603
    %v704 = vunpack.c.l.b16 %v604
    %v705 = vunpack.c.h.b16 %v604
    %v706 = vunpack.c.l.b16 %v605
    %v707 = vunpack.c.h.b16 %v605
    %v708 = vunpack.c.l.b16 %v606
    %v709 = vunpack.c.h.b16 %v606
    %v710 = vunpack.c.l.b16 %v607
    %v711 = vunpack.c.h.b16 %v607
    %v712 = vunpack.c.l.b16 %v608
    %v713 = vunpack.c.h.b16 %v608
    %v714 = vunpack.c.l.b16 %v609
    %v715 = vunpack.c.h.b16 %v609
    %v716 = vunpack.c.l.b16 %v610
    %v717 = vunpack.c.h.b16 %v610
    %v718 = vunpack.c.l.b16 %v611
    %v719 = vunpack.c.h.b16 %v611
    %v720 = vpack.c.b16 %v658, %v656
    %v721 = vpack.c.b16 %v659, %v657
    %v722 = vpack.c.b16 %v662, %v660
    %v723 = vpack.c.b16 %v663, %v661
    %v724 = vpack.c.b16 %v666, %v664
    %v725 = vpack.c.b16 %v667, %v665
    %v726 = vpack.c.b16 %v670, %v668
    %v727 = vpack.c.b16 %v671, %v669
    %v728 = vpack.c.b16 %v674, %v672
    %v729 = vpack.c.b16 %v675, %v673
    %v730 = vpack.c.b16 %v678, %v676
    %v731 = vpack.c.b16 %v679, %v677
    %v732 = vpack.c.b16 %v682, %v680
    %v733 = vpack.c.b16 %v683, %v681
    %v734 = vpack.c.b16 %v686, %v684
    %v735 = vpack.c.b16 %v687, %v685
    %v736 = vpack.c.b16 %v690, %v688
    %v737 = vpack.c.b16 %v691, %v689
    %v738 = vpack.c.b16 %v694, %v692
    %v739 = vpack.c.b16 %v695, %v693
    %v740 = vpack.c.b16 %v698, %v696
    %v741 = vpack.c.b16 %v699, %v697
    %v742 = vpack.c.b16 %v702, %v700
    %v743 = vpack.c.b16 %v703, %v701
    %v744 = vpack.c.b16 %v706, %v704
    %v745 = vpack.c.b16 %v707, %v705
    %v746 = vpack.c.b16 %v710, %v708
    %v747 = vpack.c.b16 %v711, %v709
    %v748 = vpack.c.b16 %v714, %v712
    %v749 = vpack.c.b16 %v715, %v713
    %v750 = vpack.c.b16 %v718, %v716
    %v751 = vpack.c.b16 %v719, %v717
    %784 = vmatprep.subr.bf16.mxu0 %v721
    %785 = vmatpush1.bf16.msra.mxu0 %v720
    %786 = vmatprep.subr.bf16.mxu0 %v723
    %787 = vmatpush1.bf16.msra.mxu0 %v722
    %788 = vmatprep.subr.bf16.mxu0 %v725
    %789 = vmatpush1.bf16.msra.mxu0 %v724
    %790 = vmatprep.subr.bf16.mxu0 %v727
    %791 = vmatpush1.bf16.msra.mxu0 %v726
    %792 = vmatprep.subr.bf16.mxu0 %v729
    %793 = vmatpush1.bf16.msra.mxu0 %v728
    %794 = vmatprep.subr.bf16.mxu0 %v731
    %795 = vmatpush1.bf16.msra.mxu0 %v730
    %796 = vmatprep.subr.bf16.mxu0 %v733
    %797 = vmatpush1.bf16.msra.mxu0 %v732
    %798 = vmatprep.subr.bf16.mxu0 %v735
    %799 = vmatpush1.bf16.msra.mxu0 %v734
    %800 = vmatprep.subr.bf16.mxu0 %v737
    %801 = vmatpush1.bf16.msra.mxu0 %v736
    %802 = vmatprep.subr.bf16.mxu0 %v739
    %803 = vmatpush1.bf16.msra.mxu0 %v738
    %804 = vmatprep.subr.bf16.mxu0 %v741
    %805 = vmatpush1.bf16.msra.mxu0 %v740
    %806 = vmatprep.subr.bf16.mxu0 %v743
    %807 = vmatpush1.bf16.msra.mxu0 %v742
    %808 = vmatprep.subr.bf16.mxu0 %v745
    %809 = vmatpush1.bf16.msra.mxu0 %v744
    %810 = vmatprep.subr.bf16.mxu0 %v747
    %811 = vmatpush1.bf16.msra.mxu0 %v746
    %812 = vmatprep.subr.bf16.mxu0 %v749
    %813 = vmatpush1.bf16.msra.mxu0 %v748
    %814 = vmatprep.subr.bf16.mxu0 %v751
    %815 = vmatpush1.bf16.msra.mxu0 %v750
    %816 = vmatprep.mubr.bf16.mxu0 %v579
    %817 = vmatmul.mubr.bf16.gmra.mrb[0].mxu0 %v578
    %v818 = vpop.f32.mrb[0].mxu0
    %v819 = vadd.f32 %v617, %v818
    %v820 = vpop.f32.mrb[0].mxu0
    %v821 = vadd.f32 %v621, %v820
    %v822 = vpop.f32.mrb[0].mxu0
    %v823 = vadd.f32 %v617, %v822
    %v824 = vpop.f32.mrb[0].mxu0
    %v825 = vadd.f32 %v621, %v824
    %826 = vdwg.mxu0
    %827 = vst [vmem:[%s7] sm:$0xff] %v819
    %828 = vst [vmem:[%s7 + $0x8] sm:$0xff] %v821
    %829 = vst [vmem:[%s7 + $0x10] sm:$0xff] %v823
    %830 = vst [vmem:[%s7 + $0x18] sm:$0xff] %v825
    // Predicated region
    $region42: #{language_model_forward.1} parent=1 // pred_check
      _
    $region43: #{language_model_forward.1} parent=1 // pred_check_branch
      %832 = sbr.rel (0) target = $region45
    $region44: #{language_model_forward.1} parent=1 // pred_region
      _
    $region45: #{language_model_forward.1} parent=1 // pred_fallthru
      _
    // Predicated region
    $region46: #{language_model_forward.1} parent=1 // pred_check
      _
    $region47: #{language_model_forward.1} parent=1 // pred_check_branch
      %834 = sbr.rel (0) target = $region49
    $region48: #{language_model_forward.1} parent=1 // pred_region
      _
    $region49: #{language_model_forward.1} parent=1 // pred_fallthru
      _
    %835 = vsyncpa [#allocation4], 1
    %836 = vsyncpa [#allocation6], 1

// kernel: language_model_forward.1
$region0: #{language_model_forward.1}
  #allocation0 [shape = 'u32[]', space=smem, size = 0x4, offset = 0x4, fixed_abs, tag = 'smem constant byte address 0x4 - core index']
  #allocation1 [shape = 'u32[144,128]{1,0:T(1,128)}', space=vmem, size = 0x12000, scoped, tag = 'internal scratch']
  #allocation2 [shape = 'bf16[16,256]{1,0:T(16,128)(2,1)}', space=vmem, size = 0x2000, scoped, tag = 'scratch operand']
  %s0 = inlined_call_operand.vmem [shape: bf16[16,256], index: 0, kind: input, shape index: {}]
  %s1 = inlined_call_operand.vmem [shape: bf16[256,256], index: 1, kind: input, shape index: {}]
  %s2 = inlined_call_operand.vmem [shape: f32[1,256], index: 2, kind: input, shape index: {}]
  %s3 = inlined_call_operand.hbm [shape: bf16[256,256], index: 3, kind: input, shape index: {}]
  %s4 = inlined_call_operand.vmem [shape: f32[1,256], index: 4, kind: input, shape index: {}]
  %s5 = inlined_call_operand.hbm [shape: bf16[256,256], index: 5, kind: input, shape index: {}]
  %s6 = inlined_call_operand.vmem [shape: f32[1,256], index: 6, kind: input, shape index: {}]
  %s7 = inlined_call_operand.vmem [shape: f32[16,256], index: 7, kind: output, shape index: {}]
  %s8 = sld [smem:[#allocation0]]
  $region50: #{language_model_forward.1} parent=0
    _
  %s10 = ssub.s32 1, %s8
  %s11 = scalar_select 0, %s10, %s8
  $region1: #{language_model_forward.1} parent=0
    #allocation3 [shape = 'u8[131072]{0}', space=vmem, size = 0x20000, scoped, tag = 'input window, operand 3, single buffered']
    #allocation4 [shape = 's32[1]{0}', space=sflag, size = 0x4, scoped, tag = 'scoped memory for language_model_forward.1']
    #allocation5 [shape = 'u8[131072]{0}', space=vmem, size = 0x20000, scoped, tag = 'input window, operand 5, single buffered']
    #allocation6 [shape = 's32[1]{0}', space=sflag, size = 0x4, scoped, tag = 'scoped memory for language_model_forward.1']
    %12 = vsyncpa [#allocation4], 0
    %13 = vsyncpa [#allocation6], 0
    // Predicated region
    $region2: #{language_model_forward.1} parent=1 // pred_check
      _
    $region3: #{language_model_forward.1} parent=1 // pred_check_branch
      %15 = sbr.rel (0) target = $region5
    $region4: #{language_model_forward.1} parent=1 // pred_region
      _
    $region5: #{language_model_forward.1} parent=1 // pred_fallthru
      _
    // Predicated region
    $region6: #{language_model_forward.1} parent=1 // pred_check
      _
    $region7: #{language_model_forward.1} parent=1 // pred_check_branch
      %17 = sbr.rel (0) target = $region9
    $region8: #{language_model_forward.1} parent=1 // pred_region
      _
    $region9: #{language_model_forward.1} parent=1 // pred_fallthru
      _
    // Predicated region
    $region10: #{language_model_forward.1} parent=1 // pred_check
      _
    $region11: #{language_model_forward.1} parent=1 // pred_check_branch
      %19 = sbr.rel (0) target = $region13
    $region12: #{language_model_forward.1} parent=1 // pred_region
      _
    $region13: #{language_model_forward.1} parent=1 // pred_fallthru
      _
    // Predicated region
    $region14: #{language_model_forward.1} parent=1 // pred_check
      _
    $region15: #{language_model_forward.1} parent=1 // pred_check_branch
      %21 = sbr.rel (0) target = $region17
    $region16: #{language_model_forward.1} parent=1 // pred_region
      %s23 = ssub.s32 4096, 4096
      %24 = vsyncadd [#allocation4], %s23
      %s25 = sshll.u32 [#allocation3], 4
      %s26 = int_to_ptr.vmem [resolvable:$true] %s25
      %31 = dma.hbm_to_vmem [thread:$0]  %s3, 4096, %s26, [#allocation4], 128, 128, 8
    $region17: #{language_model_forward.1} parent=1 // pred_fallthru
      _
    // Predicated region
    $region18: #{language_model_forward.1} parent=1 // pred_check
      _
    $region19: #{language_model_forward.1} parent=1 // pred_check_branch
      %33 = sbr.rel (0) target = $region21
    $region20: #{language_model_forward.1} parent=1 // pred_region
      _
    $region21: #{language_model_forward.1} parent=1 // pred_fallthru
      _
    // Predicated region
    $region22: #{language_model_forward.1} parent=1 // pred_check
      _
    $region23: #{language_model_forward.1} parent=1 // pred_check_branch
      %35 = sbr.rel (0) target = $region25
    $region24: #{language_model_forward.1} parent=1 // pred_region
      %s37 = ssub.s32 4096, 4096
      %38 = vsyncadd [#allocation6], %s37
      %s39 = sshll.u32 [#allocation5], 4
      %s40 = int_to_ptr.vmem [resolvable:$true] %s39
      %45 = dma.hbm_to_vmem [thread:$0]  %s5, 4096, %s40, [#allocation6], 128, 128, 8
    $region25: #{language_model_forward.1} parent=1 // pred_fallthru
      _
    // Predicated region
    $region26: #{language_model_forward.1} parent=1 // pred_check
      _
    $region27: #{language_model_forward.1} parent=1 // pred_check_branch
      %47 = sbr.rel (0) target = $region29
    $region28: #{language_model_forward.1} parent=1 // pred_region
      _
    $region29: #{language_model_forward.1} parent=1 // pred_fallthru
      _
    // Predicated region
    $region30: #{language_model_forward.1} parent=1 // pred_check
      _
    $region31: #{language_model_forward.1} parent=1 // pred_check_branch
      %49 = sbr.rel (0) target = $region33
    $region32: #{language_model_forward.1} parent=1 // pred_region
      %50 = dma.done [#allocation4], 4096
    $region33: #{language_model_forward.1} parent=1 // pred_fallthru
      _
    // Predicated region
    $region34: #{language_model_forward.1} parent=1 // pred_check
      _
    $region35: #{language_model_forward.1} parent=1 // pred_check_branch
      %52 = sbr.rel (0) target = $region37
    $region36: #{language_model_forward.1} parent=1 // pred_region
      %53 = dma.done [#allocation6], 4096
    $region37: #{language_model_forward.1} parent=1 // pred_fallthru
      _
    %p54 = scmp.eq.s32.totalorder 0, 0
    // Predicated region
    $region38: #{language_model_forward.1} parent=1 // pred_check
      %p55 = pneg %p54
    $region39: #{language_model_forward.1} parent=1 // pred_check_branch
      %57 = sbr.rel (%p55) target = $region41
    $region40: #{language_model_forward.1} parent=1 // pred_region
      %v58 = vld [vmem:[%s0] sm:$0xff]
      %v59 = vld [vmem:[%s0 + $0x8] sm:$0xff]
      %v60 = vld [vmem:[%s1] sm:$0xff]
      %v61 = vld [vmem:[%s1 + $0x8] sm:$0xff]
      %v62 = vld [vmem:[%s1 + $0x10] sm:$0xff]
      %v63 = vld [vmem:[%s1 + $0x18] sm:$0xff]
      %v64 = vld [vmem:[%s1 + $0x20] sm:$0xff]
      %v65 = vld [vmem:[%s1 + $0x28] sm:$0xff]
      %v66 = vld [vmem:[%s1 + $0x30] sm:$0xff]
      %v67 = vld [vmem:[%s1 + $0x38] sm:$0xff]
      %v68 = vld [vmem:[%s1 + $0x40] sm:$0xff]
      %v69 = vld [vmem:[%s1 + $0x48] sm:$0xff]
      %v70 = vld [vmem:[%s1 + $0x50] sm:$0xff]
      %v71 = vld [vmem:[%s1 + $0x58] sm:$0xff]
      %v72 = vld [vmem:[%s1 + $0x60] sm:$0xff]
      %v73 = vld [vmem:[%s1 + $0x68] sm:$0xff]
      %v74 = vld [vmem:[%s1 + $0x70] sm:$0xff]
      %v75 = vld [vmem:[%s1 + $0x78] sm:$0xff]
      %v76 = vld [vmem:[%s1 + $0x80] sm:$0xff]
      %v77 = vld [vmem:[%s1 + $0x88] sm:$0xff]
      %v78 = vld [vmem:[%s1 + $0x90] sm:$0xff]
      %v79 = vld [vmem:[%s1 + $0x98] sm:$0xff]
      %v80 = vld [vmem:[%s1 + $0xa0] sm:$0xff]
      %v81 = vld [vmem:[%s1 + $0xa8] sm:$0xff]
      %v82 = vld [vmem:[%s1 + $0xb0] sm:$0xff]
      %v83 = vld [vmem:[%s1 + $0xb8] sm:$0xff]
      %v84 = vld [vmem:[%s1 + $0xc0] sm:$0xff]
      %v85 = vld [vmem:[%s1 + $0xc8] sm:$0xff]
      %v86 = vld [vmem:[%s1 + $0xd0] sm:$0xff]
      %v87 = vld [vmem:[%s1 + $0xd8] sm:$0xff]
      %v88 = vld [vmem:[%s1 + $0xe0] sm:$0xff]
      %v89 = vld [vmem:[%s1 + $0xe8] sm:$0xff]
      %v90 = vld [vmem:[%s1 + $0xf0] sm:$0xff]
      %v91 = vld [vmem:[%s1 + $0xf8] sm:$0xff]
      %v92 = vld [vmem:[%s2] sm:$0x3]
      %v94 = vlaneseq
      %v95 = vshrl.u32 %v94, 7
      %v96 = vsub.s32 0, %v95
      %v97 = vrot.slane %v92, %v96
      %v98 = vlaneseq
      %v99 = vshrl.u32 %v98, 7
      %v100 = vsub.s32 1, %v99
      %v101 = vrot.slane %v92, %v100
      %v106 = vunpack.c.l.b16 %v58
      %v107 = vunpack.c.h.b16 %v58
      %v108 = vunpack.c.l.b16 %v59
      %v109 = vunpack.c.h.b16 %v59
      %v110 = vpack.c.b16 %v108, %v106
      %v111 = vpack.c.b16 %v109, %v107
      %v146 = vunpack.c.l.b16 %v60
      %v147 = vunpack.c.h.b16 %v60
      %v148 = vunpack.c.l.b16 %v61
      %v149 = vunpack.c.h.b16 %v61
      %v150 = vunpack.c.l.b16 %v62
      %v151 = vunpack.c.h.b16 %v62
      %v152 = vunpack.c.l.b16 %v63
      %v153 = vunpack.c.h.b16 %v63
      %v154 = vunpack.c.l.b16 %v64
      %v155 = vunpack.c.h.b16 %v64
      %v156 = vunpack.c.l.b16 %v65
      %v157 = vunpack.c.h.b16 %v65
      %v158 = vunpack.c.l.b16 %v66
      %v159 = vunpack.c.h.b16 %v66
      %v160 = vunpack.c.l.b16 %v67
      %v161 = vunpack.c.h.b16 %v67
      %v162 = vunpack.c.l.b16 %v68
      %v163 = vunpack.c.h.b16 %v68
      %v164 = vunpack.c.l.b16 %v69
      %v165 = vunpack.c.h.b16 %v69
      %v166 = vunpack.c.l.b16 %v70
      %v167 = vunpack.c.h.b16 %v70
      %v168 = vunpack.c.l.b16 %v71
      %v169 = vunpack.c.h.b16 %v71
      %v170 = vunpack.c.l.b16 %v72
      %v171 = vunpack.c.h.b16 %v72
      %v172 = vunpack.c.l.b16 %v73
      %v173 = vunpack.c.h.b16 %v73
      %v174 = vunpack.c.l.b16 %v74
      %v175 = vunpack.c.h.b16 %v74
      %v176 = vunpack.c.l.b16 %v75
      %v177 = vunpack.c.h.b16 %v75
      %v178 = vunpack.c.l.b16 %v76
      %v179 = vunpack.c.h.b16 %v76
      %v180 = vunpack.c.l.b16 %v77
      %v181 = vunpack.c.h.b16 %v77
      %v182 = vunpack.c.l.b16 %v78
      %v183 = vunpack.c.h.b16 %v78
      %v184 = vunpack.c.l.b16 %v79
      %v185 = vunpack.c.h.b16 %v79
      %v186 = vunpack.c.l.b16 %v80
      %v187 = vunpack.c.h.b16 %v80
      %v188 = vunpack.c.l.b16 %v81
      %v189 = vunpack.c.h.b16 %v81
      %v190 = vunpack.c.l.b16 %v82
      %v191 = vunpack.c.h.b16 %v82
      %v192 = vunpack.c.l.b16 %v83
      %v193 = vunpack.c.h.b16 %v83
      %v194 = vunpack.c.l.b16 %v84
      %v195 = vunpack.c.h.b16 %v84
      %v196 = vunpack.c.l.b16 %v85
      %v197 = vunpack.c.h.b16 %v85
      %v198 = vunpack.c.l.b16 %v86
      %v199 = vunpack.c.h.b16 %v86
      %v200 = vunpack.c.l.b16 %v87
      %v201 = vunpack.c.h.b16 %v87
      %v202 = vunpack.c.l.b16 %v88
      %v203 = vunpack.c.h.b16 %v88
      %v204 = vunpack.c.l.b16 %v89
      %v205 = vunpack.c.h.b16 %v89
      %v206 = vunpack.c.l.b16 %v90
      %v207 = vunpack.c.h.b16 %v90
      %v208 = vunpack.c.l.b16 %v91
      %v209 = vunpack.c.h.b16 %v91
      %v210 = vpack.c.b16 %v148, %v146
      %v211 = vpack.c.b16 %v149, %v147
      %v212 = vpack.c.b16 %v152, %v150
      %v213 = vpack.c.b16 %v153, %v151
      %v214 = vpack.c.b16 %v156, %v154
      %v215 = vpack.c.b16 %v157, %v155
      %v216 = vpack.c.b16 %v160, %v158
      %v217 = vpack.c.b16 %v161, %v159
      %v218 = vpack.c.b16 %v164, %v162
      %v219 = vpack.c.b16 %v165, %v163
      %v220 = vpack.c.b16 %v168, %v166
      %v221 = vpack.c.b16 %v169, %v167
      %v222 = vpack.c.b16 %v172, %v170
      %v223 = vpack.c.b16 %v173, %v171
      %v224 = vpack.c.b16 %v176, %v174
      %v225 = vpack.c.b16 %v177, %v175
      %v226 = vpack.c.b16 %v180, %v178
      %v227 = vpack.c.b16 %v181, %v179
      %v228 = vpack.c.b16 %v184, %v182
      %v229 = vpack.c.b16 %v185, %v183
      %v230 = vpack.c.b16 %v188, %v186
      %v231 = vpack.c.b16 %v189, %v187
      %v232 = vpack.c.b16 %v192, %v190
      %v233 = vpack.c.b16 %v193, %v191
      %v234 = vpack.c.b16 %v196, %v194
      %v235 = vpack.c.b16 %v197, %v195
      %v236 = vpack.c.b16 %v200, %v198
      %v237 = vpack.c.b16 %v201, %v199
      %v238 = vpack.c.b16 %v204, %v202
      %v239 = vpack.c.b16 %v205, %v203
      %v240 = vpack.c.b16 %v208, %v206
      %v241 = vpack.c.b16 %v209, %v207
      %274 = vmatprep.subr.bf16.mxu0 %v211
      %275 = vmatpush1.bf16.msra.mxu0 %v210
      %276 = vmatprep.subr.bf16.mxu0 %v213
      %277 = vmatpush1.bf16.msra.mxu0 %v212
      %278 = vmatprep.subr.bf16.mxu0 %v215
      %279 = vmatpush1.bf16.msra.mxu0 %v214
      %280 = vmatprep.subr.bf16.mxu0 %v217
      %281 = vmatpush1.bf16.msra.mxu0 %v216
      %282 = vmatprep.subr.bf16.mxu0 %v219
      %283 = vmatpush1.bf16.msra.mxu0 %v218
      %284 = vmatprep.subr.bf16.mxu0 %v221
      %285 = vmatpush1.bf16.msra.mxu0 %v220
      %286 = vmatprep.subr.bf16.mxu0 %v223
      %287 = vmatpush1.bf16.msra.mxu0 %v222
      %288 = vmatprep.subr.bf16.mxu0 %v225
      %289 = vmatpush1.bf16.msra.mxu0 %v224
      %290 = vmatprep.subr.bf16.mxu0 %v227
      %291 = vmatpush1.bf16.msra.mxu0 %v226
      %292 = vmatprep.subr.bf16.mxu0 %v229
      %293 = vmatpush1.bf16.msra.mxu0 %v228
      %294 = vmatprep.subr.bf16.mxu0 %v231
      %295 = vmatpush1.bf16.msra.mxu0 %v230
      %296 = vmatprep.subr.bf16.mxu0 %v233
      %297 = vmatpush1.bf16.msra.mxu0 %v232
      %298 = vmatprep.subr.bf16.mxu0 %v235
      %299 = vmatpush1.bf16.msra.mxu0 %v234
      %300 = vmatprep.subr.bf16.mxu0 %v237
      %301 = vmatpush1.bf16.msra.mxu0 %v236
      %302 = vmatprep.subr.bf16.mxu0 %v239
      %303 = vmatpush1.bf16.msra.mxu0 %v238
      %304 = vmatprep.subr.bf16.mxu0 %v241
      %305 = vmatpush1.bf16.msra.mxu0 %v240
      %306 = vmatprep.mubr.bf16.mxu0 %v111
      %307 = vmatmul.mubr.bf16.gmra.mrb[0].mxu0 %v110
      %v308 = vpop.f32.mrb[0].mxu0
      %v309 = vadd.f32 %v97, %v308
      %v310 = vpop.f32.mrb[0].mxu0
      %v311 = vadd.f32 %v101, %v310
      %v312 = vpop.f32.mrb[0].mxu0
      %v313 = vadd.f32 %v97, %v312
      %v314 = vpop.f32.mrb[0].mxu0
      %v315 = vadd.f32 %v101, %v314
      %316 = vdwg.mxu0
      %v317 = vtanh.pop %v309
      %v318 = vtanh.pop %v311
      %v319 = vtanh.pop %v313
      %v320 = vtanh.pop %v315
      %v321 = vpack.c.bf16 %v319, %v317
      %v322 = vpack.c.bf16 %v320, %v318
      %v323 = vld [vmem:[#allocation3] sm:$0xff]
      %v324 = vld [vmem:[#allocation3 + $0x8] sm:$0xff]
      %v325 = vld [vmem:[#allocation3 + $0x10] sm:$0xff]
      %v326 = vld [vmem:[#allocation3 + $0x18] sm:$0xff]
      %v327 = vld [vmem:[#allocation3 + $0x20] sm:$0xff]
      %v328 = vld [vmem:[#allocation3 + $0x28] sm:$0xff]
      %v329 = vld [vmem:[#allocation3 + $0x30] sm:$0xff]
      %v330 = vld [vmem:[#allocation3 + $0x38] sm:$0xff]
      %v331 = vld [vmem:[#allocation3 + $0x40] sm:$0xff]
      %v332 = vld [vmem:[#allocation3 + $0x48] sm:$0xff]
      %v333 = vld [vmem:[#allocation3 + $0x50] sm:$0xff]
      %v334 = vld [vmem:[#allocation3 + $0x58] sm:$0xff]
      %v335 = vld [vmem:[#allocation3 + $0x60] sm:$0xff]
      %v336 = vld [vmem:[#allocation3 + $0x68] sm:$0xff]
      %v337 = vld [vmem:[#allocation3 + $0x70] sm:$0xff]
      %v338 = vld [vmem:[#allocation3 + $0x78] sm:$0xff]
      %v339 = vld [vmem:[#allocation3 + $0x80] sm:$0xff]
      %v340 = vld [vmem:[#allocation3 + $0x88] sm:$0xff]
      %v341 = vld [vmem:[#allocation3 + $0x90] sm:$0xff]
      %v342 = vld [vmem:[#allocation3 + $0x98] sm:$0xff]
      %v343 = vld [vmem:[#allocation3 + $0xa0] sm:$0xff]
      %v344 = vld [vmem:[#allocation3 + $0xa8] sm:$0xff]
      %v345 = vld [vmem:[#allocation3 + $0xb0] sm:$0xff]
      %v346 = vld [vmem:[#allocation3 + $0xb8] sm:$0xff]
      %v347 = vld [vmem:[#allocation3 + $0xc0] sm:$0xff]
      %v348 = vld [vmem:[#allocation3 + $0xc8] sm:$0xff]
      %v349 = vld [vmem:[#allocation3 + $0xd0] sm:$0xff]
      %v350 = vld [vmem:[#allocation3 + $0xd8] sm:$0xff]
      %v351 = vld [vmem:[#allocation3 + $0xe0] sm:$0xff]
      %v352 = vld [vmem:[#allocation3 + $0xe8] sm:$0xff]
      %v353 = vld [vmem:[#allocation3 + $0xf0] sm:$0xff]
      %v354 = vld [vmem:[#allocation3 + $0xf8] sm:$0xff]
      %v355 = vld [vmem:[%s4] sm:$0x3]
      %v357 = vlaneseq
      %v358 = vshrl.u32 %v357, 7
      %v359 = vsub.s32 0, %v358
      %v360 = vrot.slane %v355, %v359
      %v361 = vlaneseq
      %v362 = vshrl.u32 %v361, 7
      %v363 = vsub.s32 1, %v362
      %v364 = vrot.slane %v355, %v363
      %v399 = vunpack.c.l.b16 %v323
      %v400 = vunpack.c.h.b16 %v323
      %v401 = vunpack.c.l.b16 %v324
      %v402 = vunpack.c.h.b16 %v324
      %v403 = vunpack.c.l.b16 %v325
      %v404 = vunpack.c.h.b16 %v325
      %v405 = vunpack.c.l.b16 %v326
      %v406 = vunpack.c.h.b16 %v326
      %v407 = vunpack.c.l.b16 %v327
      %v408 = vunpack.c.h.b16 %v327
      %v409 = vunpack.c.l.b16 %v328
      %v410 = vunpack.c.h.b16 %v328
      %v411 = vunpack.c.l.b16 %v329
      %v412 = vunpack.c.h.b16 %v329
      %v413 = vunpack.c.l.b16 %v330
      %v414 = vunpack.c.h.b16 %v330
      %v415 = vunpack.c.l.b16 %v331
      %v416 = vunpack.c.h.b16 %v331
      %v417 = vunpack.c.l.b16 %v332
      %v418 = vunpack.c.h.b16 %v332
      %v419 = vunpack.c.l.b16 %v333
      %v420 = vunpack.c.h.b16 %v333
      %v421 = vunpack.c.l.b16 %v334
      %v422 = vunpack.c.h.b16 %v334
      %v423 = vunpack.c.l.b16 %v335
      %v424 = vunpack.c.h.b16 %v335
      %v425 = vunpack.c.l.b16 %v336
      %v426 = vunpack.c.h.b16 %v336
      %v427 = vunpack.c.l.b16 %v337
      %v428 = vunpack.c.h.b16 %v337
      %v429 = vunpack.c.l.b16 %v338
      %v430 = vunpack.c.h.b16 %v338
      %v431 = vunpack.c.l.b16 %v339
      %v432 = vunpack.c.h.b16 %v339
      %v433 = vunpack.c.l.b16 %v340
      %v434 = vunpack.c.h.b16 %v340
      %v435 = vunpack.c.l.b16 %v341
      %v436 = vunpack.c.h.b16 %v341
      %v437 = vunpack.c.l.b16 %v342
      %v438 = vunpack.c.h.b16 %v342
      %v439 = vunpack.c.l.b16 %v343
      %v440 = vunpack.c.h.b16 %v343
      %v441 = vunpack.c.l.b16 %v344
      %v442 = vunpack.c.h.b16 %v344
      %v443 = vunpack.c.l.b16 %v345
      %v444 = vunpack.c.h.b16 %v345
      %v445 = vunpack.c.l.b16 %v346
      %v446 = vunpack.c.h.b16 %v346
      %v447 = vunpack.c.l.b16 %v347
      %v448 = vunpack.c.h.b16 %v347
      %v449 = vunpack.c.l.b16 %v348
      %v450 = vunpack.c.h.b16 %v348
      %v451 = vunpack.c.l.b16 %v349
      %v452 = vunpack.c.h.b16 %v349
      %v453 = vunpack.c.l.b16 %v350
      %v454 = vunpack.c.h.b16 %v350
      %v455 = vunpack.c.l.b16 %v351
      %v456 = vunpack.c.h.b16 %v351
      %v457 = vunpack.c.l.b16 %v352
      %v458 = vunpack.c.h.b16 %v352
      %v459 = vunpack.c.l.b16 %v353
      %v460 = vunpack.c.h.b16 %v353
      %v461 = vunpack.c.l.b16 %v354
      %v462 = vunpack.c.h.b16 %v354
      %v463 = vpack.c.b16 %v401, %v399
      %v464 = vpack.c.b16 %v402, %v400
      %v465 = vpack.c.b16 %v405, %v403
      %v466 = vpack.c.b16 %v406, %v404
      %v467 = vpack.c.b16 %v409, %v407
      %v468 = vpack.c.b16 %v410, %v408
      %v469 = vpack.c.b16 %v413, %v411
      %v470 = vpack.c.b16 %v414, %v412
      %v471 = vpack.c.b16 %v417, %v415
      %v472 = vpack.c.b16 %v418, %v416
      %v473 = vpack.c.b16 %v421, %v419
      %v474 = vpack.c.b16 %v422, %v420
      %v475 = vpack.c.b16 %v425, %v423
      %v476 = vpack.c.b16 %v426, %v424
      %v477 = vpack.c.b16 %v429, %v427
      %v478 = vpack.c.b16 %v430, %v428
      %v479 = vpack.c.b16 %v433, %v431
      %v480 = vpack.c.b16 %v434, %v432
      %v481 = vpack.c.b16 %v437, %v435
      %v482 = vpack.c.b16 %v438, %v436
      %v483 = vpack.c.b16 %v441, %v439
      %v484 = vpack.c.b16 %v442, %v440
      %v485 = vpack.c.b16 %v445, %v443
      %v486 = vpack.c.b16 %v446, %v444
      %v487 = vpack.c.b16 %v449, %v447
      %v488 = vpack.c.b16 %v450, %v448
      %v489 = vpack.c.b16 %v453, %v451
      %v490 = vpack.c.b16 %v454, %v452
      %v491 = vpack.c.b16 %v457, %v455
      %v492 = vpack.c.b16 %v458, %v456
      %v493 = vpack.c.b16 %v461, %v459
      %v494 = vpack.c.b16 %v462, %v460
      %527 = vmatprep.subr.bf16.mxu0 %v464
      %528 = vmatpush1.bf16.msra.mxu0 %v463
      %529 = vmatprep.subr.bf16.mxu0 %v466
      %530 = vmatpush1.bf16.msra.mxu0 %v465
      %531 = vmatprep.subr.bf16.mxu0 %v468
      %532 = vmatpush1.bf16.msra.mxu0 %v467
      %533 = vmatprep.subr.bf16.mxu0 %v470
      %534 = vmatpush1.bf16.msra.mxu0 %v469
      %535 = vmatprep.subr.bf16.mxu0 %v472
      %536 = vmatpush1.bf16.msra.mxu0 %v471
      %537 = vmatprep.subr.bf16.mxu0 %v474
      %538 = vmatpush1.bf16.msra.mxu0 %v473
      %539 = vmatprep.subr.bf16.mxu0 %v476
      %540 = vmatpush1.bf16.msra.mxu0 %v475
      %541 = vmatprep.subr.bf16.mxu0 %v478
      %542 = vmatpush1.bf16.msra.mxu0 %v477
      %543 = vmatprep.subr.bf16.mxu0 %v480
      %544 = vmatpush1.bf16.msra.mxu0 %v479
      %545 = vmatprep.subr.bf16.mxu0 %v482
      %546 = vmatpush1.bf16.msra.mxu0 %v481
      %547 = vmatprep.subr.bf16.mxu0 %v484
      %548 = vmatpush1.bf16.msra.mxu0 %v483
      %549 = vmatprep.subr.bf16.mxu0 %v486
      %550 = vmatpush1.bf16.msra.mxu0 %v485
      %551 = vmatprep.subr.bf16.mxu0 %v488
      %552 = vmatpush1.bf16.msra.mxu0 %v487
      %553 = vmatprep.subr.bf16.mxu0 %v490
      %554 = vmatpush1.bf16.msra.mxu0 %v489
      %555 = vmatprep.subr.bf16.mxu0 %v492
      %556 = vmatpush1.bf16.msra.mxu0 %v491
      %557 = vmatprep.subr.bf16.mxu0 %v494
      %558 = vmatpush1.bf16.msra.mxu0 %v493
      %559 = vmatprep.mubr.bf16.mxu0 %v322
      %560 = vmatmul.mubr.bf16.gmra.mrb[0].mxu0 %v321
      %v561 = vpop.f32.mrb[0].mxu0
      %v562 = vadd.f32 %v360, %v561
      %v563 = vpop.f32.mrb[0].mxu0
      %v564 = vadd.f32 %v364, %v563
      %v565 = vpop.f32.mrb[0].mxu0
      %v566 = vadd.f32 %v360, %v565
      %v567 = vpop.f32.mrb[0].mxu0
      %v568 = vadd.f32 %v364, %v567
      %569 = vdwg.mxu0
      %v570 = vtanh.pop %v562
      %v571 = vtanh.pop %v564
      %v572 = vtanh.pop %v566
      %v573 = vtanh.pop %v568
      %v574 = vpack.c.bf16 %v572, %v570
      %v575 = vpack.c.bf16 %v573, %v571
      %576 = vst [vmem:[#allocation2] sm:$0xff] %v574
      %577 = vst [vmem:[#allocation2 + $0x8] sm:$0xff] %v575
    $region41: #{language_model_forward.1} parent=1 // pred_fallthru
      _
    %v578 = vld [vmem:[#allocation2] sm:$0xff]
    %v579 = vld [vmem:[#allocation2 + $0x8] sm:$0xff]
    %v580 = vld [vmem:[#allocation5] sm:$0xff]
    %v581 = vld [vmem:[#allocation5 + $0x8] sm:$0xff]
    %v582 = vld [vmem:[#allocation5 + $0x10] sm:$0xff]
    %v583 = vld [vmem:[#allocation5 + $0x18] sm:$0xff]
    %v584 = vld [vmem:[#allocation5 + $0x20] sm:$0xff]
    %v585 = vld [vmem:[#allocation5 + $0x28] sm:$0xff]
    %v586 = vld [vmem:[#allocation5 + $0x30] sm:$0xff]
    %v587 = vld [vmem:[#allocation5 + $0x38] sm:$0xff]
    %v588 = vld [vmem:[#allocation5 + $0x40] sm:$0xff]
    %v589 = vld [vmem:[#allocation5 + $0x48] sm:$0xff]
    %v590 = vld [vmem:[#allocation5 + $0x50] sm:$0xff]
    %v591 = vld [vmem:[#allocation5 + $0x58] sm:$0xff]
    %v592 = vld [vmem:[#allocation5 + $0x60] sm:$0xff]
    %v593 = vld [vmem:[#allocation5 + $0x68] sm:$0xff]
    %v594 = vld [vmem:[#allocation5 + $0x70] sm:$0xff]
    %v595 = vld [vmem:[#allocation5 + $0x78] sm:$0xff]
    %v596 = vld [vmem:[#allocation5 + $0x80] sm:$0xff]
    %v597 = vld [vmem:[#allocation5 + $0x88] sm:$0xff]
    %v598 = vld [vmem:[#allocation5 + $0x90] sm:$0xff]
    %v599 = vld [vmem:[#allocation5 + $0x98] sm:$0xff]
    %v600 = vld [vmem:[#allocation5 + $0xa0] sm:$0xff]
    %v601 = vld [vmem:[#allocation5 + $0xa8] sm:$0xff]
    %v602 = vld [vmem:[#allocation5 + $0xb0] sm:$0xff]
    %v603 = vld [vmem:[#allocation5 + $0xb8] sm:$0xff]
    %v604 = vld [vmem:[#allocation5 + $0xc0] sm:$0xff]
    %v605 = vld [vmem:[#allocation5 + $0xc8] sm:$0xff]
    %v606 = vld [vmem:[#allocation5 + $0xd0] sm:$0xff]
    %v607 = vld [vmem:[#allocation5 + $0xd8] sm:$0xff]
    %v608 = vld [vmem:[#allocation5 + $0xe0] sm:$0xff]
    %v609 = vld [vmem:[#allocation5 + $0xe8] sm:$0xff]
    %v610 = vld [vmem:[#allocation5 + $0xf0] sm:$0xff]
    %v611 = vld [vmem:[#allocation5 + $0xf8] sm:$0xff]
    %v612 = vld [vmem:[%s6] sm:$0x3]
    %v614 = vlaneseq
    %v615 = vshrl.u32 %v614, 7
    %v616 = vsub.s32 0, %v615
    %v617 = vrot.slane %v612, %v616
    %v618 = vlaneseq
    %v619 = vshrl.u32 %v618, 7
    %v620 = vsub.s32 1, %v619
    %v621 = vrot.slane %v612, %v620
    %v656 = vunpack.c.l.b16 %v580
    %v657 = vunpack.c.h.b16 %v580
    %v658 = vunpack.c.l.b16 %v581
    %v659 = vunpack.c.h.b16 %v581
    %v660 = vunpack.c.l.b16 %v582
    %v661 = vunpack.c.h.b16 %v582
    %v662 = vunpack.c.l.b16 %v583
    %v663 = vunpack.c.h.b16 %v583
    %v664 = vunpack.c.l.b16 %v584
    %v665 = vunpack.c.h.b16 %v584
    %v666 = vunpack.c.l.b16 %v585
    %v667 = vunpack.c.h.b16 %v585
    %v668 = vunpack.c.l.b16 %v586
    %v669 = vunpack.c.h.b16 %v586
    %v670 = vunpack.c.l.b16 %v587
    %v671 = vunpack.c.h.b16 %v587
    %v672 = vunpack.c.l.b16 %v588
    %v673 = vunpack.c.h.b16 %v588
    %v674 = vunpack.c.l.b16 %v589
    %v675 = vunpack.c.h.b16 %v589
    %v676 = vunpack.c.l.b16 %v590
    %v677 = vunpack.c.h.b16 %v590
    %v678 = vunpack.c.l.b16 %v591
    %v679 = vunpack.c.h.b16 %v591
    %v680 = vunpack.c.l.b16 %v592
    %v681 = vunpack.c.h.b16 %v592
    %v682 = vunpack.c.l.b16 %v593
    %v683 = vunpack.c.h.b16 %v593
    %v684 = vunpack.c.l.b16 %v594
    %v685 = vunpack.c.h.b16 %v594
    %v686 = vunpack.c.l.b16 %v595
    %v687 = vunpack.c.h.b16 %v595
    %v688 = vunpack.c.l.b16 %v596
    %v689 = vunpack.c.h.b16 %v596
    %v690 = vunpack.c.l.b16 %v597
    %v691 = vunpack.c.h.b16 %v597
    %v692 = vunpack.c.l.b16 %v598
    %v693 = vunpack.c.h.b16 %v598
    %v694 = vunpack.c.l.b16 %v599
    %v695 = vunpack.c.h.b16 %v599
    %v696 = vunpack.c.l.b16 %v600
    %v697 = vunpack.c.h.b16 %v600
    %v698 = vunpack.c.l.b16 %v601
    %v699 = vunpack.c.h.b16 %v601
    %v700 = vunpack.c.l.b16 %v602
    %v701 = vunpack.c.h.b16 %v602
    %v702 = vunpack.c.l.b16 %v603
    %v703 = vunpack.c.h.b16 %v603
    %v704 = vunpack.c.l.b16 %v604
    %v705 = vunpack.c.h.b16 %v604
    %v706 = vunpack.c.l.b16 %v605
    %v707 = vunpack.c.h.b16 %v605
    %v708 = vunpack.c.l.b16 %v606
    %v709 = vunpack.c.h.b16 %v606
    %v710 = vunpack.c.l.b16 %v607
    %v711 = vunpack.c.h.b16 %v607
    %v712 = vunpack.c.l.b16 %v608
    %v713 = vunpack.c.h.b16 %v608
    %v714 = vunpack.c.l.b16 %v609
    %v715 = vunpack.c.h.b16 %v609
    %v716 = vunpack.c.l.b16 %v610
    %v717 = vunpack.c.h.b16 %v610
    %v718 = vunpack.c.l.b16 %v611
    %v719 = vunpack.c.h.b16 %v611
    %v720 = vpack.c.b16 %v658, %v656
    %v721 = vpack.c.b16 %v659, %v657
    %v722 = vpack.c.b16 %v662, %v660
    %v723 = vpack.c.b16 %v663, %v661
    %v724 = vpack.c.b16 %v666, %v664
    %v725 = vpack.c.b16 %v667, %v665
    %v726 = vpack.c.b16 %v670, %v668
    %v727 = vpack.c.b16 %v671, %v669
    %v728 = vpack.c.b16 %v674, %v672
    %v729 = vpack.c.b16 %v675, %v673
    %v730 = vpack.c.b16 %v678, %v676
    %v731 = vpack.c.b16 %v679, %v677
    %v732 = vpack.c.b16 %v682, %v680
    %v733 = vpack.c.b16 %v683, %v681
    %v734 = vpack.c.b16 %v686, %v684
    %v735 = vpack.c.b16 %v687, %v685
    %v736 = vpack.c.b16 %v690, %v688
    %v737 = vpack.c.b16 %v691, %v689
    %v738 = vpack.c.b16 %v694, %v692
    %v739 = vpack.c.b16 %v695, %v693
    %v740 = vpack.c.b16 %v698, %v696
    %v741 = vpack.c.b16 %v699, %v697
    %v742 = vpack.c.b16 %v702, %v700
    %v743 = vpack.c.b16 %v703, %v701
    %v744 = vpack.c.b16 %v706, %v704
    %v745 = vpack.c.b16 %v707, %v705
    %v746 = vpack.c.b16 %v710, %v708
    %v747 = vpack.c.b16 %v711, %v709
    %v748 = vpack.c.b16 %v714, %v712
    %v749 = vpack.c.b16 %v715, %v713
    %v750 = vpack.c.b16 %v718, %v716
    %v751 = vpack.c.b16 %v719, %v717
    %784 = vmatprep.subr.bf16.mxu0 %v721
    %785 = vmatpush1.bf16.msra.mxu0 %v720
    %786 = vmatprep.subr.bf16.mxu0 %v723
    %787 = vmatpush1.bf16.msra.mxu0 %v722
    %788 = vmatprep.subr.bf16.mxu0 %v725
    %789 = vmatpush1.bf16.msra.mxu0 %v724
    %790 = vmatprep.subr.bf16.mxu0 %v727
    %791 = vmatpush1.bf16.msra.mxu0 %v726
    %792 = vmatprep.subr.bf16.mxu0 %v729
    %793 = vmatpush1.bf16.msra.mxu0 %v728
    %794 = vmatprep.subr.bf16.mxu0 %v731
    %795 = vmatpush1.bf16.msra.mxu0 %v730
    %796 = vmatprep.subr.bf16.mxu0 %v733
    %797 = vmatpush1.bf16.msra.mxu0 %v732
    %798 = vmatprep.subr.bf16.mxu0 %v735
    %799 = vmatpush1.bf16.msra.mxu0 %v734
    %800 = vmatprep.subr.bf16.mxu0 %v737
    %801 = vmatpush1.bf16.msra.mxu0 %v736
    %802 = vmatprep.subr.bf16.mxu0 %v739
    %803 = vmatpush1.bf16.msra.mxu0 %v738
    %804 = vmatprep.subr.bf16.mxu0 %v741
    %805 = vmatpush1.bf16.msra.mxu0 %v740
    %806 = vmatprep.subr.bf16.mxu0 %v743
    %807 = vmatpush1.bf16.msra.mxu0 %v742
    %808 = vmatprep.subr.bf16.mxu0 %v745
    %809 = vmatpush1.bf16.msra.mxu0 %v744
    %810 = vmatprep.subr.bf16.mxu0 %v747
    %811 = vmatpush1.bf16.msra.mxu0 %v746
    %812 = vmatprep.subr.bf16.mxu0 %v749
    %813 = vmatpush1.bf16.msra.mxu0 %v748
    %814 = vmatprep.subr.bf16.mxu0 %v751
    %815 = vmatpush1.bf16.msra.mxu0 %v750
    %816 = vmatprep.mubr.bf16.mxu0 %v579
    %817 = vmatmul.mubr.bf16.gmra.mrb[0].mxu0 %v578
    %v818 = vpop.f32.mrb[0].mxu0
    %v819 = vadd.f32 %v617, %v818
    %v820 = vpop.f32.mrb[0].mxu0
    %v821 = vadd.f32 %v621, %v820
    %v822 = vpop.f32.mrb[0].mxu0
    %v823 = vadd.f32 %v617, %v822
    %v824 = vpop.f32.mrb[0].mxu0
    %v825 = vadd.f32 %v621, %v824
    %826 = vdwg.mxu0
    %827 = vst [vmem:[%s7] sm:$0xff] %v819
    %828 = vst [vmem:[%s7 + $0x8] sm:$0xff] %v821
    %829 = vst [vmem:[%s7 + $0x10] sm:$0xff] %v823
    %830 = vst [vmem:[%s7 + $0x18] sm:$0xff] %v825
    // Predicated region
    $region42: #{language_model_forward.1} parent=1 // pred_check
      _
    $region43: #{language_model_forward.1} parent=1 // pred_check_branch
      %832 = sbr.rel (0) target = $region45
    $region44: #{language_model_forward.1} parent=1 // pred_region
      _
    $region45: #{language_model_forward.1} parent=1 // pred_fallthru
      _
    // Predicated region
    $region46: #{language_model_forward.1} parent=1 // pred_check
      _
    $region47: #{language_model_forward.1} parent=1 // pred_check_branch
      %834 = sbr.rel (0) target = $region49
    $region48: #{language_model_forward.1} parent=1 // pred_region
      _
    $region49: #{language_model_forward.1} parent=1 // pred_fallthru
      _
    %835 = vsyncpa [#allocation4], 1
    %836 = vsyncpa [#allocation6], 1

</llo_original>
